<compile_context>
chip_gen: v5e
topology: v5e:2x2
jax: 0.10.0
libtpu: 0.0.40
codegen_flags: <defaults>
</compile_context>

<pallas_src>
import functools

import numpy as np

import jax
import jax.numpy as jnp
from jax.experimental import pallas as pl
from jax.experimental.pallas import tpu as pltpu


# ------------------------------- helpers ----------------------------------- #

def _round_up(x, m):
    return ((x + m - 1) // m) * m


def _conv_out_hw(h, w, k, s):
    return (h - k) // s + 1, (w - k) // s + 1


def conv_out_size(input_shape):
    _, H, W = input_shape
    h1, w1 = _conv_out_hw(H, W, 8, 4)
    h2, w2 = _conv_out_hw(h1, w1, 4, 2)
    h3, w3 = _conv_out_hw(h2, w2, 3, 1)
    return 64 * h3 * w3


# --------------------------- fused Pallas kernel --------------------------- #

def _agent_nn_kernel(p1_ref, w1_ref, b1_ref,
                     sel2_ref, w2_ref, b2_ref,
                     sel3_ref, w3_ref, b3_ref,
                     fsel_ref, fc1w_ref, fc1b_ref,
                     fc2w_ref, fc2b_ref,
                     out_ref, *,
                     taps2, cin2, cout2, taps3, cin3, cout3,
                     m2_pad, m3_pad, mf_pad, s3, nf1):
    f32 = jnp.float32

    # conv1: one MXU matmul on the (kh,kw,c)-ordered patch matrix + bias + ReLU
    a1 = jnp.dot(p1_ref[...], w1_ref[...], preferred_element_type=f32)
    a1 = jnp.maximum(a1 + b1_ref[...], 0.0)                        # (M1, 32)

    # conv2: per-tap accumulation; the strided patch gather is a one-hot matmul
    acc2 = jnp.zeros((m2_pad, cout2), f32)
    for t in range(taps2):
        rows = jnp.dot(sel2_ref[t], a1, preferred_element_type=f32)   # (m2_pad, cin2)
        acc2 += jnp.dot(rows, w2_ref[t * cin2:(t + 1) * cin2, :],
                        preferred_element_type=f32)
    a2 = jnp.maximum(acc2 + b2_ref[...], 0.0)                      # (m2_pad, 64)

    # conv3: same tap-accumulation scheme
    acc3 = jnp.zeros((m3_pad, cout3), f32)
    for t in range(taps3):
        rows = jnp.dot(sel3_ref[t], a2, preferred_element_type=f32)   # (m3_pad, cin3)
        acc3 += jnp.dot(rows, w3_ref[t * cin3:(t + 1) * cin3, :],
                        preferred_element_type=f32)
    a3 = jnp.maximum(acc3 + b3_ref[...], 0.0)                      # (m3_pad, 64)

    # flatten (PyTorch NCHW order folded into fc1 weight blocks) + fc1 + ReLU
    h = jnp.zeros((mf_pad, nf1), f32)
    for t in range(s3):
        rows = jnp.dot(fsel_ref[t], a3, preferred_element_type=f32)   # (mf_pad, 64)
        h += jnp.dot(rows, fc1w_ref[t], preferred_element_type=f32)
    h = jnp.maximum(h + fc1b_ref[...], 0.0)                        # (mf_pad, 512)

    # fc2: lane-dense store (columns padded to 128, sliced back in the wrapper)
    out = jnp.dot(h, fc2w_ref[...], preferred_element_type=f32) + fc2b_ref[...]
    out_ref[...] = out.astype(out_ref.dtype)


# --------------------- one-time plan / weight preparation ------------------ #

def _build_conv_sel(B, hi, wi, k, s, m_pad, src_cols):
    """One-hot row-selection matrix per kernel tap t=(i,j): output row
    r = (b*Ho+p)*Wo + q picks source row (b*hi + p*s+i)*wi + (q*s+j).
    Padded rows (>= B*Ho*Wo) are all-zero and never selected downstream."""
    ho, wo = _conv_out_hw(hi, wi, k, s)
    sel = np.zeros((k * k, m_pad, src_cols), np.float32)
    for i in range(k):
        for j in range(k):
            t = i * k + j
            for b in range(B):
                for p in range(ho):
                    for q in range(wo):
                        r = (b * ho + p) * wo + q
                        src = (b * hi + p * s + i) * wi + (q * s + j)
                        sel[t, r, src] = 1.0
    return sel


def _build_fc_sel(B, h3, w3, mf_pad, src_cols):
    """One-hot selector per conv3 spatial position pq: fc row b picks
    conv3 row b*h3*w3 + pq.  Padded rows are all-zero."""
    s3 = h3 * w3
    sel = np.zeros((s3, mf_pad, src_cols), np.float32)
    for pq in range(s3):
        for b in range(B):
            sel[pq, b, b * s3 + pq] = 1.0
    return sel


def _im2col_natural(x_nhwc, k, s):
    """VALID kxk/stride-s patches of the raw input, rows (b,p,q), columns in
    natural (kh, kw, c) order -- no transpose of the patch tensor."""
    B, H, W, C = x_nhwc.shape
    ho, wo = _conv_out_hw(H, W, k, s)
    cols = []
    for i in range(k):
        for j in range(k):
            cols.append(x_nhwc[:, i:i + s * (ho - 1) + 1:s,
                                  j:j + s * (wo - 1) + 1:s, :])   # (B, ho, wo, C)
    p = jnp.stack(cols, axis=3)                                   # (B, ho, wo, k*k, C)
    return p.reshape(B * ho * wo, k * k * C)


def make_forward(params, input_shape, n_actions, batch):
    C, H, W = input_shape
    k1, s1, k2, s2, k3, s3k = 8, 4, 4, 2, 3, 1
    c1, c2, c3, nf1 = 32, 64, 64, 512
    B = batch

    h1, w1 = _conv_out_hw(H, W, k1, s1)
    h2, w2 = _conv_out_hw(h1, w1, k2, s2)
    h3, w3 = _conv_out_hw(h2, w2, k3, s3k)
    s3 = h3 * w3
    m1 = B * h1 * w1
    m2_pad = _round_up(B * h2 * w2, 8)
    m3_pad = _round_up(B * h3 * w3, 8)
    mf_pad = _round_up(B, 8)
    na_pad = _round_up(n_actions, 128)

    # ---- one-time weight permutations (no per-forward layout cost) ----
    w1m = params['conv1_w'].transpose(2, 3, 1, 0).reshape(k1 * k1 * C, c1)
    w2m = params['conv2_w'].transpose(2, 3, 1, 0).reshape(k2 * k2 * c1, c2)
    w3m = params['conv3_w'].transpose(2, 3, 1, 0).reshape(k3 * k3 * c2, c3)
    b1 = params['conv1_b'].reshape(1, c1)
    b2 = params['conv2_b'].reshape(1, c2)
    b3 = params['conv3_b'].reshape(1, c3)
    # fc1: fold PyTorch's NCHW flatten into a per-spatial-tap row gather of fc1_w.
    fc1w = params['fc1_w'].reshape(c3, s3, nf1).transpose(1, 0, 2)       # (s3, 64, 512)
    fc1b = params['fc1_b'].reshape(1, nf1)
    # fc2: pad columns to a lane-dense 128; wrapper slices the real logits back.
    fc2w = jnp.zeros((nf1, na_pad), jnp.float32).at[:, :n_actions].set(params['fc2_w'])
    fc2b = jnp.zeros((1, na_pad), jnp.float32).at[:, :n_actions].set(
        params['fc2_b'].reshape(1, n_actions))

    # ---- one-time one-hot gather matrices (shape-only, data independent) ----
    sel2 = jnp.asarray(_build_conv_sel(B, h1, w1, k2, s2, m2_pad, m1))
    sel3 = jnp.asarray(_build_conv_sel(B, h2, w2, k3, s3k, m3_pad, m2_pad))
    fsel = jnp.asarray(_build_fc_sel(B, h3, w3, mf_pad, m3_pad))

    kernel = functools.partial(
        _agent_nn_kernel,
        taps2=k2 * k2, cin2=c1, cout2=c2,
        taps3=k3 * k3, cin3=c2, cout3=c3,
        m2_pad=m2_pad, m3_pad=m3_pad, mf_pad=mf_pad, s3=s3, nf1=nf1)

    in_shapes = [
        (m1, k1 * k1 * C), (k1 * k1 * C, c1), (1, c1),
        (k2 * k2, m2_pad, m1), (k2 * k2 * c1, c2), (1, c2),
        (k3 * k3, m3_pad, m2_pad), (k3 * k3 * c2, c3), (1, c3),
        (s3, mf_pad, m3_pad), (s3, c3, nf1), (1, nf1),
        (nf1, na_pad), (1, na_pad),
    ]

    def _full_spec(shape):
        nd = len(shape)

        def imap():                     # gridless call: index_map takes no args
            return (0,) * nd
        return pl.BlockSpec(shape, imap)

    flops = 2 * (m1 * (k1 * k1 * C) * c1
                 + k2 * k2 * (m2_pad * m1 * c1 + m2_pad * c1 * c2)
                 + k3 * k3 * (m3_pad * m2_pad * c2 + m3_pad * c2 * c3)
                 + s3 * (mf_pad * m3_pad * c3 + mf_pad * c3 * nf1)
                 + mf_pad * nf1 * na_pad)
    bytes_accessed = 4 * (sum(int(np.prod(s)) for s in in_shapes) + mf_pad * na_pad)

    fused = pl.pallas_call(
        kernel,
        out_shape=jax.ShapeDtypeStruct((mf_pad, na_pad), jnp.float32),
        in_specs=[_full_spec(s) for s in in_shapes],
        out_specs=_full_spec((mf_pad, na_pad)),
        compiler_params=pltpu.CompilerParams(vmem_limit_bytes=32 * 1024 * 1024),
        cost_estimate=pl.CostEstimate(flops=int(flops), transcendentals=0,
                                      bytes_accessed=int(bytes_accessed)),
    )

    consts = (w1m, b1, sel2, w2m, b2, sel3, w3m, b3, fsel, fc1w, fc1b, fc2w, fc2b)

    @jax.jit
    def forward(x_nchw):
        x_nhwc = jnp.transpose(x_nchw, (0, 2, 3, 1)).astype(jnp.float32)
        p1 = _im2col_natural(x_nhwc, k1, s1)          # raw-input im2col, no transpose
        out = fused(p1, *consts)
        return out[:B, :n_actions]

    # TODO(synk): at batch >= ~128 (e.g. real 84x84 Atari inputs) this should
    # grow a parallel grid over the row dimension (megacore) and tile within
    # the v7x 64 MiB VMEM budget; unnecessary at these toy sizes.
    return forward


# ------------------------- parameters & reference -------------------------- #

def init_params(key, input_shape, n_actions):
    C = input_shape[0]
    co = conv_out_size(input_shape)
    ks = jax.random.split(key, 10)

    def w(k, shape, scale=0.05):
        return scale * jax.random.normal(k, shape, dtype=jnp.float32)

    return {
        'conv1_w': w(ks[0], (32, C, 8, 8)),   'conv1_b': w(ks[1], (32,), 0.01),
        'conv2_w': w(ks[2], (64, 32, 4, 4)),  'conv2_b': w(ks[3], (64,), 0.01),
        'conv3_w': w(ks[4], (64, 64, 3, 3)),  'conv3_b': w(ks[5], (64,), 0.01),
        'fc1_w': w(ks[6], (co, 512)),         'fc1_b': w(ks[7], (512,), 0.01),
        'fc2_w': w(ks[8], (512, n_actions)),  'fc2_b': w(ks[9], (n_actions,), 0.01),
    }


def reference_forward(x_nchw, params):
    def conv(x, w_, b_, s):
        y = jax.lax.conv_general_dilated(
            x, w_, (s, s), 'VALID',
            dimension_numbers=('NCHW', 'OIHW', 'NCHW'))
        return jnp.maximum(y + b_.reshape(1, -1, 1, 1), 0.0)

    x = conv(x_nchw, params['conv1_w'], params['conv1_b'], 4)
    x = conv(x, params['conv2_w'], params['conv2_b'], 2)
    x = conv(x, params['conv3_w'], params['conv3_b'], 1)
    x = x.reshape(x.shape[0], -1)
    x = jnp.maximum(x @ params['fc1_w'] + params['fc1_b'], 0.0)
    return x @ params['fc2_w'] + params['fc2_b']


# ---------------------------------- main ----------------------------------- #

if __name__ == "__main__":
    # 36x36 is the smallest spatial size that survives the 8/4, 4/2, 3/1 conv
    # stack (36 -> 8 -> 3 -> 1); batch=2, 4 input channels, 6 actions.
    input_shape = (4, 36, 36)
    batch, n_actions = 2, 6

    key = jax.random.PRNGKey(0)
    k_x, k_p = jax.random.split(key)
    x = jax.random.normal(k_x, (batch, *input_shape), dtype=jnp.float32)
    params = init_params(k_p, input_shape, n_actions)

    forward = make_forward(params, input_shape, n_actions, batch)
    out = jax.block_until_ready(forward(x))

    ref = jax.block_until_ready(reference_forward(x, params))
    assert out.shape == (batch, n_actions), out.shape
    err = float(jnp.max(jnp.abs(out - ref)))
    assert jnp.allclose(out, ref, atol=1e-3, rtol=1e-3), f"mismatch: max abs err {err}"

    # TODO(synk): `freeze()` (requires_grad) and the torch device-selection
    # print ('mps'/'cpu') have no Pallas/JAX equivalent in a pure forward pass;
    # intentionally omitted.
    print("KERNEL_OK")
</pallas_src>

<mosaic_0001>
module attributes {stable_mosaic.version = 11 : i64} {
  func.func @_agent_nn_kernel(%arg0: memref<128x256xf32, #tpu.memory_space<vmem>>, %arg1: memref<256x32xf32, #tpu.memory_space<vmem>>, %arg2: memref<1x32xf32, #tpu.memory_space<vmem>>, %arg3: memref<16x24x128xf32, #tpu.memory_space<vmem>>, %arg4: memref<512x64xf32, #tpu.memory_space<vmem>>, %arg5: memref<1x64xf32, #tpu.memory_space<vmem>>, %arg6: memref<9x8x24xf32, #tpu.memory_space<vmem>>, %arg7: memref<576x64xf32, #tpu.memory_space<vmem>>, %arg8: memref<1x64xf32, #tpu.memory_space<vmem>>, %arg9: memref<1x8x8xf32, #tpu.memory_space<vmem>>, %arg10: memref<1x64x512xf32, #tpu.memory_space<vmem>>, %arg11: memref<1x512xf32, #tpu.memory_space<vmem>>, %arg12: memref<512x128xf32, #tpu.memory_space<vmem>>, %arg13: memref<1x128xf32, #tpu.memory_space<vmem>>, %arg14: memref<8x128xf32, #tpu.memory_space<vmem>>) attributes {dimension_semantics = [], scalar_prefetch = 0 : i64, scratch_operands = 0 : i64, tpu.core_type = #tpu.core_type<tc>} {
    %c0 = arith.constant 0 : index
    %c0_0 = arith.constant 0 : index
    %0 = vector.load %arg0[%c0, %c0_0] : memref<128x256xf32, #tpu.memory_space<vmem>>, vector<128x256xf32>
    %c0_1 = arith.constant 0 : index
    %c0_2 = arith.constant 0 : index
    %1 = vector.load %arg1[%c0_1, %c0_2] : memref<256x32xf32, #tpu.memory_space<vmem>>, vector<256x32xf32>
    %cst = arith.constant dense<0.000000e+00> : vector<128x32xf32>
    %2 = tpu.matmul %0, %1, %cst {dimension_numbers = #tpu.dot_dimension_numbers<[1], [0], [0], [1], [0, 0, 1, 1], [], []>} : vector<128x256xf32>, vector<256x32xf32>, vector<128x32xf32> -> vector<128x32xf32>
    %c0_3 = arith.constant 0 : index
    %c0_4 = arith.constant 0 : index
    %3 = vector.load %arg2[%c0_3, %c0_4] : memref<1x32xf32, #tpu.memory_space<vmem>>, vector<1x32xf32>
    %4 = vector.broadcast %3 : vector<1x32xf32> to vector<128x32xf32>
    %5 = arith.addf %2, %4 : vector<128x32xf32>
    %cst_5 = arith.constant 0.000000e+00 : f32
    %6 = vector.broadcast %cst_5 : f32 to vector<128x32xf32>
    %7 = arith.maximumf %5, %6 : vector<128x32xf32>
    %cst_6 = arith.constant 0.000000e+00 : f32
    %8 = vector.broadcast %cst_6 : f32 to vector<24x64xf32>
    %c0_7 = arith.constant 0 : index
    %c0_8 = arith.constant 0 : index
    %c0_9 = arith.constant 0 : index
    %9 = vector.load %arg3[%c0_7, %c0_8, %c0_9] : memref<16x24x128xf32, #tpu.memory_space<vmem>>, vector<1x24x128xf32>
    %10 = vector.shape_cast %9 : vector<1x24x128xf32> to vector<24x128xf32>
    %cst_10 = arith.constant dense<0.000000e+00> : vector<24x32xf32>
    %11 = tpu.matmul %10, %7, %cst_10 {dimension_numbers = #tpu.dot_dimension_numbers<[1], [0], [0], [1], [0, 0, 1, 1], [], []>} : vector<24x128xf32>, vector<128x32xf32>, vector<24x32xf32> -> vector<24x32xf32>
    %c0_11 = arith.constant 0 : index
    %c0_12 = arith.constant 0 : index
    %12 = vector.load %arg4[%c0_11, %c0_12] : memref<512x64xf32, #tpu.memory_space<vmem>>, vector<32x64xf32>
    %cst_13 = arith.constant dense<0.000000e+00> : vector<24x64xf32>
    %13 = tpu.matmul %11, %12, %cst_13 {dimension_numbers = #tpu.dot_dimension_numbers<[1], [0], [0], [1], [0, 0, 1, 1], [], []>} : vector<24x32xf32>, vector<32x64xf32>, vector<24x64xf32> -> vector<24x64xf32>
    %14 = arith.addf %8, %13 : vector<24x64xf32>
    %c1 = arith.constant 1 : index
    %c0_14 = arith.constant 0 : index
    %c0_15 = arith.constant 0 : index
    %15 = vector.load %arg3[%c1, %c0_14, %c0_15] : memref<16x24x128xf32, #tpu.memory_space<vmem>>, vector<1x24x128xf32>
    %16 = vector.shape_cast %15 : vector<1x24x128xf32> to vector<24x128xf32>
    %cst_16 = arith.constant dense<0.000000e+00> : vector<24x32xf32>
    %17 = tpu.matmul %16, %7, %cst_16 {dimension_numbers = #tpu.dot_dimension_numbers<[1], [0], [0], [1], [0, 0, 1, 1], [], []>} : vector<24x128xf32>, vector<128x32xf32>, vector<24x32xf32> -> vector<24x32xf32>
    %c32 = arith.constant 32 : index
    %c0_17 = arith.constant 0 : index
    %18 = vector.load %arg4[%c32, %c0_17] : memref<512x64xf32, #tpu.memory_space<vmem>>, vector<32x64xf32>
    %cst_18 = arith.constant dense<0.000000e+00> : vector<24x64xf32>
    %19 = tpu.matmul %17, %18, %cst_18 {dimension_numbers = #tpu.dot_dimension_numbers<[1], [0], [0], [1], [0, 0, 1, 1], [], []>} : vector<24x32xf32>, vector<32x64xf32>, vector<24x64xf32> -> vector<24x64xf32>
    %20 = arith.addf %14, %19 : vector<24x64xf32>
    %c2 = arith.constant 2 : index
    %c0_19 = arith.constant 0 : index
    %c0_20 = arith.constant 0 : index
    %21 = vector.load %arg3[%c2, %c0_19, %c0_20] : memref<16x24x128xf32, #tpu.memory_space<vmem>>, vector<1x24x128xf32>
    %22 = vector.shape_cast %21 : vector<1x24x128xf32> to vector<24x128xf32>
    %cst_21 = arith.constant dense<0.000000e+00> : vector<24x32xf32>
    %23 = tpu.matmul %22, %7, %cst_21 {dimension_numbers = #tpu.dot_dimension_numbers<[1], [0], [0], [1], [0, 0, 1, 1], [], []>} : vector<24x128xf32>, vector<128x32xf32>, vector<24x32xf32> -> vector<24x32xf32>
    %c64 = arith.constant 64 : index
    %c0_22 = arith.constant 0 : index
    %24 = vector.load %arg4[%c64, %c0_22] : memref<512x64xf32, #tpu.memory_space<vmem>>, vector<32x64xf32>
    %cst_23 = arith.constant dense<0.000000e+00> : vector<24x64xf32>
    %25 = tpu.matmul %23, %24, %cst_23 {dimension_numbers = #tpu.dot_dimension_numbers<[1], [0], [0], [1], [0, 0, 1, 1], [], []>} : vector<24x32xf32>, vector<32x64xf32>, vector<24x64xf32> -> vector<24x64xf32>
    %26 = arith.addf %20, %25 : vector<24x64xf32>
    %c3 = arith.constant 3 : index
    %c0_24 = arith.constant 0 : index
    %c0_25 = arith.constant 0 : index
    %27 = vector.load %arg3[%c3, %c0_24, %c0_25] : memref<16x24x128xf32, #tpu.memory_space<vmem>>, vector<1x24x128xf32>
    %28 = vector.shape_cast %27 : vector<1x24x128xf32> to vector<24x128xf32>
    %cst_26 = arith.constant dense<0.000000e+00> : vector<24x32xf32>
    %29 = tpu.matmul %28, %7, %cst_26 {dimension_numbers = #tpu.dot_dimension_numbers<[1], [0], [0], [1], [0, 0, 1, 1], [], []>} : vector<24x128xf32>, vector<128x32xf32>, vector<24x32xf32> -> vector<24x32xf32>
    %c96 = arith.constant 96 : index
    %c0_27 = arith.constant 0 : index
    %30 = vector.load %arg4[%c96, %c0_27] : memref<512x64xf32, #tpu.memory_space<vmem>>, vector<32x64xf32>
    %cst_28 = arith.constant dense<0.000000e+00> : vector<24x64xf32>
    %31 = tpu.matmul %29, %30, %cst_28 {dimension_numbers = #tpu.dot_dimension_numbers<[1], [0], [0], [1], [0, 0, 1, 1], [], []>} : vector<24x32xf32>, vector<32x64xf32>, vector<24x64xf32> -> vector<24x64xf32>
    %32 = arith.addf %26, %31 : vector<24x64xf32>
    %c4 = arith.constant 4 : index
    %c0_29 = arith.constant 0 : index
    %c0_30 = arith.constant 0 : index
    %33 = vector.load %arg3[%c4, %c0_29, %c0_30] : memref<16x24x128xf32, #tpu.memory_space<vmem>>, vector<1x24x128xf32>
    %34 = vector.shape_cast %33 : vector<1x24x128xf32> to vector<24x128xf32>
    %cst_31 = arith.constant dense<0.000000e+00> : vector<24x32xf32>
    %35 = tpu.matmul %34, %7, %cst_31 {dimension_numbers = #tpu.dot_dimension_numbers<[1], [0], [0], [1], [0, 0, 1, 1], [], []>} : vector<24x128xf32>, vector<128x32xf32>, vector<24x32xf32> -> vector<24x32xf32>
    %c128 = arith.constant 128 : index
    %c0_32 = arith.constant 0 : index
    %36 = vector.load %arg4[%c128, %c0_32] : memref<512x64xf32, #tpu.memory_space<vmem>>, vector<32x64xf32>
    %cst_33 = arith.constant dense<0.000000e+00> : vector<24x64xf32>
    %37 = tpu.matmul %35, %36, %cst_33 {dimension_numbers = #tpu.dot_dimension_numbers<[1], [0], [0], [1], [0, 0, 1, 1], [], []>} : vector<24x32xf32>, vector<32x64xf32>, vector<24x64xf32> -> vector<24x64xf32>
    %38 = arith.addf %32, %37 : vector<24x64xf32>
    %c5 = arith.constant 5 : index
    %c0_34 = arith.constant 0 : index
    %c0_35 = arith.constant 0 : index
    %39 = vector.load %arg3[%c5, %c0_34, %c0_35] : memref<16x24x128xf32, #tpu.memory_space<vmem>>, vector<1x24x128xf32>
    %40 = vector.shape_cast %39 : vector<1x24x128xf32> to vector<24x128xf32>
    %cst_36 = arith.constant dense<0.000000e+00> : vector<24x32xf32>
    %41 = tpu.matmul %40, %7, %cst_36 {dimension_numbers = #tpu.dot_dimension_numbers<[1], [0], [0], [1], [0, 0, 1, 1], [], []>} : vector<24x128xf32>, vector<128x32xf32>, vector<24x32xf32> -> vector<24x32xf32>
    %c160 = arith.constant 160 : index
    %c0_37 = arith.constant 0 : index
    %42 = vector.load %arg4[%c160, %c0_37] : memref<512x64xf32, #tpu.memory_space<vmem>>, vector<32x64xf32>
    %cst_38 = arith.constant dense<0.000000e+00> : vector<24x64xf32>
    %43 = tpu.matmul %41, %42, %cst_38 {dimension_numbers = #tpu.dot_dimension_numbers<[1], [0], [0], [1], [0, 0, 1, 1], [], []>} : vector<24x32xf32>, vector<32x64xf32>, vector<24x64xf32> -> vector<24x64xf32>
    %44 = arith.addf %38, %43 : vector<24x64xf32>
    %c6 = arith.constant 6 : index
    %c0_39 = arith.constant 0 : index
    %c0_40 = arith.constant 0 : index
    %45 = vector.load %arg3[%c6, %c0_39, %c0_40] : memref<16x24x128xf32, #tpu.memory_space<vmem>>, vector<1x24x128xf32>
    %46 = vector.shape_cast %45 : vector<1x24x128xf32> to vector<24x128xf32>
    %cst_41 = arith.constant dense<0.000000e+00> : vector<24x32xf32>
    %47 = tpu.matmul %46, %7, %cst_41 {dimension_numbers = #tpu.dot_dimension_numbers<[1], [0], [0], [1], [0, 0, 1, 1], [], []>} : vector<24x128xf32>, vector<128x32xf32>, vector<24x32xf32> -> vector<24x32xf32>
    %c192 = arith.constant 192 : index
    %c0_42 = arith.constant 0 : index
    %48 = vector.load %arg4[%c192, %c0_42] : memref<512x64xf32, #tpu.memory_space<vmem>>, vector<32x64xf32>
    %cst_43 = arith.constant dense<0.000000e+00> : vector<24x64xf32>
    %49 = tpu.matmul %47, %48, %cst_43 {dimension_numbers = #tpu.dot_dimension_numbers<[1], [0], [0], [1], [0, 0, 1, 1], [], []>} : vector<24x32xf32>, vector<32x64xf32>, vector<24x64xf32> -> vector<24x64xf32>
    %50 = arith.addf %44, %49 : vector<24x64xf32>
    %c7 = arith.constant 7 : index
    %c0_44 = arith.constant 0 : index
    %c0_45 = arith.constant 0 : index
    %51 = vector.load %arg3[%c7, %c0_44, %c0_45] : memref<16x24x128xf32, #tpu.memory_space<vmem>>, vector<1x24x128xf32>
    %52 = vector.shape_cast %51 : vector<1x24x128xf32> to vector<24x128xf32>
    %cst_46 = arith.constant dense<0.000000e+00> : vector<24x32xf32>
    %53 = tpu.matmul %52, %7, %cst_46 {dimension_numbers = #tpu.dot_dimension_numbers<[1], [0], [0], [1], [0, 0, 1, 1], [], []>} : vector<24x128xf32>, vector<128x32xf32>, vector<24x32xf32> -> vector<24x32xf32>
    %c224 = arith.constant 224 : index
    %c0_47 = arith.constant 0 : index
    %54 = vector.load %arg4[%c224, %c0_47] : memref<512x64xf32, #tpu.memory_space<vmem>>, vector<32x64xf32>
    %cst_48 = arith.constant dense<0.000000e+00> : vector<24x64xf32>
    %55 = tpu.matmul %53, %54, %cst_48 {dimension_numbers = #tpu.dot_dimension_numbers<[1], [0], [0], [1], [0, 0, 1, 1], [], []>} : vector<24x32xf32>, vector<32x64xf32>, vector<24x64xf32> -> vector<24x64xf32>
    %56 = arith.addf %50, %55 : vector<24x64xf32>
    %c8 = arith.constant 8 : index
    %c0_49 = arith.constant 0 : index
    %c0_50 = arith.constant 0 : index
    %57 = vector.load %arg3[%c8, %c0_49, %c0_50] : memref<16x24x128xf32, #tpu.memory_space<vmem>>, vector<1x24x128xf32>
    %58 = vector.shape_cast %57 : vector<1x24x128xf32> to vector<24x128xf32>
    %cst_51 = arith.constant dense<0.000000e+00> : vector<24x32xf32>
    %59 = tpu.matmul %58, %7, %cst_51 {dimension_numbers = #tpu.dot_dimension_numbers<[1], [0], [0], [1], [0, 0, 1, 1], [], []>} : vector<24x128xf32>, vector<128x32xf32>, vector<24x32xf32> -> vector<24x32xf32>
    %c256 = arith.constant 256 : index
    %c0_52 = arith.constant 0 : index
    %60 = vector.load %arg4[%c256, %c0_52] : memref<512x64xf32, #tpu.memory_space<vmem>>, vector<32x64xf32>
    %cst_53 = arith.constant dense<0.000000e+00> : vector<24x64xf32>
    %61 = tpu.matmul %59, %60, %cst_53 {dimension_numbers = #tpu.dot_dimension_numbers<[1], [0], [0], [1], [0, 0, 1, 1], [], []>} : vector<24x32xf32>, vector<32x64xf32>, vector<24x64xf32> -> vector<24x64xf32>
    %62 = arith.addf %56, %61 : vector<24x64xf32>
    %c9 = arith.constant 9 : index
    %c0_54 = arith.constant 0 : index
    %c0_55 = arith.constant 0 : index
    %63 = vector.load %arg3[%c9, %c0_54, %c0_55] : memref<16x24x128xf32, #tpu.memory_space<vmem>>, vector<1x24x128xf32>
    %64 = vector.shape_cast %63 : vector<1x24x128xf32> to vector<24x128xf32>
    %cst_56 = arith.constant dense<0.000000e+00> : vector<24x32xf32>
    %65 = tpu.matmul %64, %7, %cst_56 {dimension_numbers = #tpu.dot_dimension_numbers<[1], [0], [0], [1], [0, 0, 1, 1], [], []>} : vector<24x128xf32>, vector<128x32xf32>, vector<24x32xf32> -> vector<24x32xf32>
    %c288 = arith.constant 288 : index
    %c0_57 = arith.constant 0 : index
    %66 = vector.load %arg4[%c288, %c0_57] : memref<512x64xf32, #tpu.memory_space<vmem>>, vector<32x64xf32>
    %cst_58 = arith.constant dense<0.000000e+00> : vector<24x64xf32>
    %67 = tpu.matmul %65, %66, %cst_58 {dimension_numbers = #tpu.dot_dimension_numbers<[1], [0], [0], [1], [0, 0, 1, 1], [], []>} : vector<24x32xf32>, vector<32x64xf32>, vector<24x64xf32> -> vector<24x64xf32>
    %68 = arith.addf %62, %67 : vector<24x64xf32>
    %c10 = arith.constant 10 : index
    %c0_59 = arith.constant 0 : index
    %c0_60 = arith.constant 0 : index
    %69 = vector.load %arg3[%c10, %c0_59, %c0_60] : memref<16x24x128xf32, #tpu.memory_space<vmem>>, vector<1x24x128xf32>
    %70 = vector.shape_cast %69 : vector<1x24x128xf32> to vector<24x128xf32>
    %cst_61 = arith.constant dense<0.000000e+00> : vector<24x32xf32>
    %71 = tpu.matmul %70, %7, %cst_61 {dimension_numbers = #tpu.dot_dimension_numbers<[1], [0], [0], [1], [0, 0, 1, 1], [], []>} : vector<24x128xf32>, vector<128x32xf32>, vector<24x32xf32> -> vector<24x32xf32>
    %c320 = arith.constant 320 : index
    %c0_62 = arith.constant 0 : index
    %72 = vector.load %arg4[%c320, %c0_62] : memref<512x64xf32, #tpu.memory_space<vmem>>, vector<32x64xf32>
    %cst_63 = arith.constant dense<0.000000e+00> : vector<24x64xf32>
    %73 = tpu.matmul %71, %72, %cst_63 {dimension_numbers = #tpu.dot_dimension_numbers<[1], [0], [0], [1], [0, 0, 1, 1], [], []>} : vector<24x32xf32>, vector<32x64xf32>, vector<24x64xf32> -> vector<24x64xf32>
    %74 = arith.addf %68, %73 : vector<24x64xf32>
    %c11 = arith.constant 11 : index
    %c0_64 = arith.constant 0 : index
    %c0_65 = arith.constant 0 : index
    %75 = vector.load %arg3[%c11, %c0_64, %c0_65] : memref<16x24x128xf32, #tpu.memory_space<vmem>>, vector<1x24x128xf32>
    %76 = vector.shape_cast %75 : vector<1x24x128xf32> to vector<24x128xf32>
    %cst_66 = arith.constant dense<0.000000e+00> : vector<24x32xf32>
    %77 = tpu.matmul %76, %7, %cst_66 {dimension_numbers = #tpu.dot_dimension_numbers<[1], [0], [0], [1], [0, 0, 1, 1], [], []>} : vector<24x128xf32>, vector<128x32xf32>, vector<24x32xf32> -> vector<24x32xf32>
    %c352 = arith.constant 352 : index
    %c0_67 = arith.constant 0 : index
    %78 = vector.load %arg4[%c352, %c0_67] : memref<512x64xf32, #tpu.memory_space<vmem>>, vector<32x64xf32>
    %cst_68 = arith.constant dense<0.000000e+00> : vector<24x64xf32>
    %79 = tpu.matmul %77, %78, %cst_68 {dimension_numbers = #tpu.dot_dimension_numbers<[1], [0], [0], [1], [0, 0, 1, 1], [], []>} : vector<24x32xf32>, vector<32x64xf32>, vector<24x64xf32> -> vector<24x64xf32>
    %80 = arith.addf %74, %79 : vector<24x64xf32>
    %c12 = arith.constant 12 : index
    %c0_69 = arith.constant 0 : index
    %c0_70 = arith.constant 0 : index
    %81 = vector.load %arg3[%c12, %c0_69, %c0_70] : memref<16x24x128xf32, #tpu.memory_space<vmem>>, vector<1x24x128xf32>
    %82 = vector.shape_cast %81 : vector<1x24x128xf32> to vector<24x128xf32>
    %cst_71 = arith.constant dense<0.000000e+00> : vector<24x32xf32>
    %83 = tpu.matmul %82, %7, %cst_71 {dimension_numbers = #tpu.dot_dimension_numbers<[1], [0], [0], [1], [0, 0, 1, 1], [], []>} : vector<24x128xf32>, vector<128x32xf32>, vector<24x32xf32> -> vector<24x32xf32>
    %c384 = arith.constant 384 : index
    %c0_72 = arith.constant 0 : index
    %84 = vector.load %arg4[%c384, %c0_72] : memref<512x64xf32, #tpu.memory_space<vmem>>, vector<32x64xf32>
    %cst_73 = arith.constant dense<0.000000e+00> : vector<24x64xf32>
    %85 = tpu.matmul %83, %84, %cst_73 {dimension_numbers = #tpu.dot_dimension_numbers<[1], [0], [0], [1], [0, 0, 1, 1], [], []>} : vector<24x32xf32>, vector<32x64xf32>, vector<24x64xf32> -> vector<24x64xf32>
    %86 = arith.addf %80, %85 : vector<24x64xf32>
    %c13 = arith.constant 13 : index
    %c0_74 = arith.constant 0 : index
    %c0_75 = arith.constant 0 : index
    %87 = vector.load %arg3[%c13, %c0_74, %c0_75] : memref<16x24x128xf32, #tpu.memory_space<vmem>>, vector<1x24x128xf32>
    %88 = vector.shape_cast %87 : vector<1x24x128xf32> to vector<24x128xf32>
    %cst_76 = arith.constant dense<0.000000e+00> : vector<24x32xf32>
    %89 = tpu.matmul %88, %7, %cst_76 {dimension_numbers = #tpu.dot_dimension_numbers<[1], [0], [0], [1], [0, 0, 1, 1], [], []>} : vector<24x128xf32>, vector<128x32xf32>, vector<24x32xf32> -> vector<24x32xf32>
    %c416 = arith.constant 416 : index
    %c0_77 = arith.constant 0 : index
    %90 = vector.load %arg4[%c416, %c0_77] : memref<512x64xf32, #tpu.memory_space<vmem>>, vector<32x64xf32>
    %cst_78 = arith.constant dense<0.000000e+00> : vector<24x64xf32>
    %91 = tpu.matmul %89, %90, %cst_78 {dimension_numbers = #tpu.dot_dimension_numbers<[1], [0], [0], [1], [0, 0, 1, 1], [], []>} : vector<24x32xf32>, vector<32x64xf32>, vector<24x64xf32> -> vector<24x64xf32>
    %92 = arith.addf %86, %91 : vector<24x64xf32>
    %c14 = arith.constant 14 : index
    %c0_79 = arith.constant 0 : index
    %c0_80 = arith.constant 0 : index
    %93 = vector.load %arg3[%c14, %c0_79, %c0_80] : memref<16x24x128xf32, #tpu.memory_space<vmem>>, vector<1x24x128xf32>
    %94 = vector.shape_cast %93 : vector<1x24x128xf32> to vector<24x128xf32>
    %cst_81 = arith.constant dense<0.000000e+00> : vector<24x32xf32>
    %95 = tpu.matmul %94, %7, %cst_81 {dimension_numbers = #tpu.dot_dimension_numbers<[1], [0], [0], [1], [0, 0, 1, 1], [], []>} : vector<24x128xf32>, vector<128x32xf32>, vector<24x32xf32> -> vector<24x32xf32>
    %c448 = arith.constant 448 : index
    %c0_82 = arith.constant 0 : index
    %96 = vector.load %arg4[%c448, %c0_82] : memref<512x64xf32, #tpu.memory_space<vmem>>, vector<32x64xf32>
    %cst_83 = arith.constant dense<0.000000e+00> : vector<24x64xf32>
    %97 = tpu.matmul %95, %96, %cst_83 {dimension_numbers = #tpu.dot_dimension_numbers<[1], [0], [0], [1], [0, 0, 1, 1], [], []>} : vector<24x32xf32>, vector<32x64xf32>, vector<24x64xf32> -> vector<24x64xf32>
    %98 = arith.addf %92, %97 : vector<24x64xf32>
    %c15 = arith.constant 15 : index
    %c0_84 = arith.constant 0 : index
    %c0_85 = arith.constant 0 : index
    %99 = vector.load %arg3[%c15, %c0_84, %c0_85] : memref<16x24x128xf32, #tpu.memory_space<vmem>>, vector<1x24x128xf32>
    %100 = vector.shape_cast %99 : vector<1x24x128xf32> to vector<24x128xf32>
    %cst_86 = arith.constant dense<0.000000e+00> : vector<24x32xf32>
    %101 = tpu.matmul %100, %7, %cst_86 {dimension_numbers = #tpu.dot_dimension_numbers<[1], [0], [0], [1], [0, 0, 1, 1], [], []>} : vector<24x128xf32>, vector<128x32xf32>, vector<24x32xf32> -> vector<24x32xf32>
    %c480 = arith.constant 480 : index
    %c0_87 = arith.constant 0 : index
    %102 = vector.load %arg4[%c480, %c0_87] : memref<512x64xf32, #tpu.memory_space<vmem>>, vector<32x64xf32>
    %cst_88 = arith.constant dense<0.000000e+00> : vector<24x64xf32>
    %103 = tpu.matmul %101, %102, %cst_88 {dimension_numbers = #tpu.dot_dimension_numbers<[1], [0], [0], [1], [0, 0, 1, 1], [], []>} : vector<24x32xf32>, vector<32x64xf32>, vector<24x64xf32> -> vector<24x64xf32>
    %104 = arith.addf %98, %103 : vector<24x64xf32>
    %c0_89 = arith.constant 0 : index
    %c0_90 = arith.constant 0 : index
    %105 = vector.load %arg5[%c0_89, %c0_90] : memref<1x64xf32, #tpu.memory_space<vmem>>, vector<1x64xf32>
    %106 = vector.broadcast %105 : vector<1x64xf32> to vector<24x64xf32>
    %107 = arith.addf %104, %106 : vector<24x64xf32>
    %cst_91 = arith.constant 0.000000e+00 : f32
    %108 = vector.broadcast %cst_91 : f32 to vector<24x64xf32>
    %109 = arith.maximumf %107, %108 : vector<24x64xf32>
    %cst_92 = arith.constant 0.000000e+00 : f32
    %110 = vector.broadcast %cst_92 : f32 to vector<8x64xf32>
    %c0_93 = arith.constant 0 : index
    %c0_94 = arith.constant 0 : index
    %c0_95 = arith.constant 0 : index
    %111 = vector.load %arg6[%c0_93, %c0_94, %c0_95] : memref<9x8x24xf32, #tpu.memory_space<vmem>>, vector<1x8x24xf32>
    %112 = vector.shape_cast %111 : vector<1x8x24xf32> to vector<8x24xf32>
    %cst_96 = arith.constant dense<0.000000e+00> : vector<8x64xf32>
    %113 = tpu.matmul %112, %109, %cst_96 {dimension_numbers = #tpu.dot_dimension_numbers<[1], [0], [0], [1], [0, 0, 1, 1], [], []>} : vector<8x24xf32>, vector<24x64xf32>, vector<8x64xf32> -> vector<8x64xf32>
    %c0_97 = arith.constant 0 : index
    %c0_98 = arith.constant 0 : index
    %114 = vector.load %arg7[%c0_97, %c0_98] : memref<576x64xf32, #tpu.memory_space<vmem>>, vector<64x64xf32>
    %cst_99 = arith.constant dense<0.000000e+00> : vector<8x64xf32>
    %115 = tpu.matmul %113, %114, %cst_99 {dimension_numbers = #tpu.dot_dimension_numbers<[1], [0], [0], [1], [0, 0, 1, 1], [], []>} : vector<8x64xf32>, vector<64x64xf32>, vector<8x64xf32> -> vector<8x64xf32>
    %116 = arith.addf %110, %115 : vector<8x64xf32>
    %c1_100 = arith.constant 1 : index
    %c0_101 = arith.constant 0 : index
    %c0_102 = arith.constant 0 : index
    %117 = vector.load %arg6[%c1_100, %c0_101, %c0_102] : memref<9x8x24xf32, #tpu.memory_space<vmem>>, vector<1x8x24xf32>
    %118 = vector.shape_cast %117 : vector<1x8x24xf32> to vector<8x24xf32>
    %cst_103 = arith.constant dense<0.000000e+00> : vector<8x64xf32>
    %119 = tpu.matmul %118, %109, %cst_103 {dimension_numbers = #tpu.dot_dimension_numbers<[1], [0], [0], [1], [0, 0, 1, 1], [], []>} : vector<8x24xf32>, vector<24x64xf32>, vector<8x64xf32> -> vector<8x64xf32>
    %c64_104 = arith.constant 64 : index
    %c0_105 = arith.constant 0 : index
    %120 = vector.load %arg7[%c64_104, %c0_105] : memref<576x64xf32, #tpu.memory_space<vmem>>, vector<64x64xf32>
    %cst_106 = arith.constant dense<0.000000e+00> : vector<8x64xf32>
    %121 = tpu.matmul %119, %120, %cst_106 {dimension_numbers = #tpu.dot_dimension_numbers<[1], [0], [0], [1], [0, 0, 1, 1], [], []>} : vector<8x64xf32>, vector<64x64xf32>, vector<8x64xf32> -> vector<8x64xf32>
    %122 = arith.addf %116, %121 : vector<8x64xf32>
    %c2_107 = arith.constant 2 : index
    %c0_108 = arith.constant 0 : index
    %c0_109 = arith.constant 0 : index
    %123 = vector.load %arg6[%c2_107, %c0_108, %c0_109] : memref<9x8x24xf32, #tpu.memory_space<vmem>>, vector<1x8x24xf32>
    %124 = vector.shape_cast %123 : vector<1x8x24xf32> to vector<8x24xf32>
    %cst_110 = arith.constant dense<0.000000e+00> : vector<8x64xf32>
    %125 = tpu.matmul %124, %109, %cst_110 {dimension_numbers = #tpu.dot_dimension_numbers<[1], [0], [0], [1], [0, 0, 1, 1], [], []>} : vector<8x24xf32>, vector<24x64xf32>, vector<8x64xf32> -> vector<8x64xf32>
    %c128_111 = arith.constant 128 : index
    %c0_112 = arith.constant 0 : index
    %126 = vector.load %arg7[%c128_111, %c0_112] : memref<576x64xf32, #tpu.memory_space<vmem>>, vector<64x64xf32>
    %cst_113 = arith.constant dense<0.000000e+00> : vector<8x64xf32>
    %127 = tpu.matmul %125, %126, %cst_113 {dimension_numbers = #tpu.dot_dimension_numbers<[1], [0], [0], [1], [0, 0, 1, 1], [], []>} : vector<8x64xf32>, vector<64x64xf32>, vector<8x64xf32> -> vector<8x64xf32>
    %128 = arith.addf %122, %127 : vector<8x64xf32>
    %c3_114 = arith.constant 3 : index
    %c0_115 = arith.constant 0 : index
    %c0_116 = arith.constant 0 : index
    %129 = vector.load %arg6[%c3_114, %c0_115, %c0_116] : memref<9x8x24xf32, #tpu.memory_space<vmem>>, vector<1x8x24xf32>
    %130 = vector.shape_cast %129 : vector<1x8x24xf32> to vector<8x24xf32>
    %cst_117 = arith.constant dense<0.000000e+00> : vector<8x64xf32>
    %131 = tpu.matmul %130, %109, %cst_117 {dimension_numbers = #tpu.dot_dimension_numbers<[1], [0], [0], [1], [0, 0, 1, 1], [], []>} : vector<8x24xf32>, vector<24x64xf32>, vector<8x64xf32> -> vector<8x64xf32>
    %c192_118 = arith.constant 192 : index
    %c0_119 = arith.constant 0 : index
    %132 = vector.load %arg7[%c192_118, %c0_119] : memref<576x64xf32, #tpu.memory_space<vmem>>, vector<64x64xf32>
    %cst_120 = arith.constant dense<0.000000e+00> : vector<8x64xf32>
    %133 = tpu.matmul %131, %132, %cst_120 {dimension_numbers = #tpu.dot_dimension_numbers<[1], [0], [0], [1], [0, 0, 1, 1], [], []>} : vector<8x64xf32>, vector<64x64xf32>, vector<8x64xf32> -> vector<8x64xf32>
    %134 = arith.addf %128, %133 : vector<8x64xf32>
    %c4_121 = arith.constant 4 : index
    %c0_122 = arith.constant 0 : index
    %c0_123 = arith.constant 0 : index
    %135 = vector.load %arg6[%c4_121, %c0_122, %c0_123] : memref<9x8x24xf32, #tpu.memory_space<vmem>>, vector<1x8x24xf32>
    %136 = vector.shape_cast %135 : vector<1x8x24xf32> to vector<8x24xf32>
    %cst_124 = arith.constant dense<0.000000e+00> : vector<8x64xf32>
    %137 = tpu.matmul %136, %109, %cst_124 {dimension_numbers = #tpu.dot_dimension_numbers<[1], [0], [0], [1], [0, 0, 1, 1], [], []>} : vector<8x24xf32>, vector<24x64xf32>, vector<8x64xf32> -> vector<8x64xf32>
    %c256_125 = arith.constant 256 : index
    %c0_126 = arith.constant 0 : index
    %138 = vector.load %arg7[%c256_125, %c0_126] : memref<576x64xf32, #tpu.memory_space<vmem>>, vector<64x64xf32>
    %cst_127 = arith.constant dense<0.000000e+00> : vector<8x64xf32>
    %139 = tpu.matmul %137, %138, %cst_127 {dimension_numbers = #tpu.dot_dimension_numbers<[1], [0], [0], [1], [0, 0, 1, 1], [], []>} : vector<8x64xf32>, vector<64x64xf32>, vector<8x64xf32> -> vector<8x64xf32>
    %140 = arith.addf %134, %139 : vector<8x64xf32>
    %c5_128 = arith.constant 5 : index
    %c0_129 = arith.constant 0 : index
    %c0_130 = arith.constant 0 : index
    %141 = vector.load %arg6[%c5_128, %c0_129, %c0_130] : memref<9x8x24xf32, #tpu.memory_space<vmem>>, vector<1x8x24xf32>
    %142 = vector.shape_cast %141 : vector<1x8x24xf32> to vector<8x24xf32>
    %cst_131 = arith.constant dense<0.000000e+00> : vector<8x64xf32>
    %143 = tpu.matmul %142, %109, %cst_131 {dimension_numbers = #tpu.dot_dimension_numbers<[1], [0], [0], [1], [0, 0, 1, 1], [], []>} : vector<8x24xf32>, vector<24x64xf32>, vector<8x64xf32> -> vector<8x64xf32>
    %c320_132 = arith.constant 320 : index
    %c0_133 = arith.constant 0 : index
    %144 = vector.load %arg7[%c320_132, %c0_133] : memref<576x64xf32, #tpu.memory_space<vmem>>, vector<64x64xf32>
    %cst_134 = arith.constant dense<0.000000e+00> : vector<8x64xf32>
    %145 = tpu.matmul %143, %144, %cst_134 {dimension_numbers = #tpu.dot_dimension_numbers<[1], [0], [0], [1], [0, 0, 1, 1], [], []>} : vector<8x64xf32>, vector<64x64xf32>, vector<8x64xf32> -> vector<8x64xf32>
    %146 = arith.addf %140, %145 : vector<8x64xf32>
    %c6_135 = arith.constant 6 : index
    %c0_136 = arith.constant 0 : index
    %c0_137 = arith.constant 0 : index
    %147 = vector.load %arg6[%c6_135, %c0_136, %c0_137] : memref<9x8x24xf32, #tpu.memory_space<vmem>>, vector<1x8x24xf32>
    %148 = vector.shape_cast %147 : vector<1x8x24xf32> to vector<8x24xf32>
    %cst_138 = arith.constant dense<0.000000e+00> : vector<8x64xf32>
    %149 = tpu.matmul %148, %109, %cst_138 {dimension_numbers = #tpu.dot_dimension_numbers<[1], [0], [0], [1], [0, 0, 1, 1], [], []>} : vector<8x24xf32>, vector<24x64xf32>, vector<8x64xf32> -> vector<8x64xf32>
    %c384_139 = arith.constant 384 : index
    %c0_140 = arith.constant 0 : index
    %150 = vector.load %arg7[%c384_139, %c0_140] : memref<576x64xf32, #tpu.memory_space<vmem>>, vector<64x64xf32>
    %cst_141 = arith.constant dense<0.000000e+00> : vector<8x64xf32>
    %151 = tpu.matmul %149, %150, %cst_141 {dimension_numbers = #tpu.dot_dimension_numbers<[1], [0], [0], [1], [0, 0, 1, 1], [], []>} : vector<8x64xf32>, vector<64x64xf32>, vector<8x64xf32> -> vector<8x64xf32>
    %152 = arith.addf %146, %151 : vector<8x64xf32>
    %c7_142 = arith.constant 7 : index
    %c0_143 = arith.constant 0 : index
    %c0_144 = arith.constant 0 : index
    %153 = vector.load %arg6[%c7_142, %c0_143, %c0_144] : memref<9x8x24xf32, #tpu.memory_space<vmem>>, vector<1x8x24xf32>
    %154 = vector.shape_cast %153 : vector<1x8x24xf32> to vector<8x24xf32>
    %cst_145 = arith.constant dense<0.000000e+00> : vector<8x64xf32>
    %155 = tpu.matmul %154, %109, %cst_145 {dimension_numbers = #tpu.dot_dimension_numbers<[1], [0], [0], [1], [0, 0, 1, 1], [], []>} : vector<8x24xf32>, vector<24x64xf32>, vector<8x64xf32> -> vector<8x64xf32>
    %c448_146 = arith.constant 448 : index
    %c0_147 = arith.constant 0 : index
    %156 = vector.load %arg7[%c448_146, %c0_147] : memref<576x64xf32, #tpu.memory_space<vmem>>, vector<64x64xf32>
    %cst_148 = arith.constant dense<0.000000e+00> : vector<8x64xf32>
    %157 = tpu.matmul %155, %156, %cst_148 {dimension_numbers = #tpu.dot_dimension_numbers<[1], [0], [0], [1], [0, 0, 1, 1], [], []>} : vector<8x64xf32>, vector<64x64xf32>, vector<8x64xf32> -> vector<8x64xf32>
    %158 = arith.addf %152, %157 : vector<8x64xf32>
    %c8_149 = arith.constant 8 : index
    %c0_150 = arith.constant 0 : index
    %c0_151 = arith.constant 0 : index
    %159 = vector.load %arg6[%c8_149, %c0_150, %c0_151] : memref<9x8x24xf32, #tpu.memory_space<vmem>>, vector<1x8x24xf32>
    %160 = vector.shape_cast %159 : vector<1x8x24xf32> to vector<8x24xf32>
    %cst_152 = arith.constant dense<0.000000e+00> : vector<8x64xf32>
    %161 = tpu.matmul %160, %109, %cst_152 {dimension_numbers = #tpu.dot_dimension_numbers<[1], [0], [0], [1], [0, 0, 1, 1], [], []>} : vector<8x24xf32>, vector<24x64xf32>, vector<8x64xf32> -> vector<8x64xf32>
    %c512 = arith.constant 512 : index
    %c0_153 = arith.constant 0 : index
    %162 = vector.load %arg7[%c512, %c0_153] : memref<576x64xf32, #tpu.memory_space<vmem>>, vector<64x64xf32>
    %cst_154 = arith.constant dense<0.000000e+00> : vector<8x64xf32>
    %163 = tpu.matmul %161, %162, %cst_154 {dimension_numbers = #tpu.dot_dimension_numbers<[1], [0], [0], [1], [0, 0, 1, 1], [], []>} : vector<8x64xf32>, vector<64x64xf32>, vector<8x64xf32> -> vector<8x64xf32>
    %164 = arith.addf %158, %163 : vector<8x64xf32>
    %c0_155 = arith.constant 0 : index
    %c0_156 = arith.constant 0 : index
    %165 = vector.load %arg8[%c0_155, %c0_156] : memref<1x64xf32, #tpu.memory_space<vmem>>, vector<1x64xf32>
    %166 = vector.broadcast %165 : vector<1x64xf32> to vector<8x64xf32>
    %167 = arith.addf %164, %166 : vector<8x64xf32>
    %cst_157 = arith.constant 0.000000e+00 : f32
    %168 = vector.broadcast %cst_157 : f32 to vector<8x64xf32>
    %169 = arith.maximumf %167, %168 : vector<8x64xf32>
    %cst_158 = arith.constant 0.000000e+00 : f32
    %170 = vector.broadcast %cst_158 : f32 to vector<8x512xf32>
    %c0_159 = arith.constant 0 : index
    %c0_160 = arith.constant 0 : index
    %c0_161 = arith.constant 0 : index
    %171 = vector.load %arg9[%c0_159, %c0_160, %c0_161] : memref<1x8x8xf32, #tpu.memory_space<vmem>>, vector<1x8x8xf32>
    %172 = vector.shape_cast %171 : vector<1x8x8xf32> to vector<8x8xf32>
    %cst_162 = arith.constant dense<0.000000e+00> : vector<8x64xf32>
    %173 = tpu.matmul %172, %169, %cst_162 {dimension_numbers = #tpu.dot_dimension_numbers<[1], [0], [0], [1], [0, 0, 1, 1], [], []>} : vector<8x8xf32>, vector<8x64xf32>, vector<8x64xf32> -> vector<8x64xf32>
    %c0_163 = arith.constant 0 : index
    %c0_164 = arith.constant 0 : index
    %c0_165 = arith.constant 0 : index
    %174 = vector.load %arg10[%c0_163, %c0_164, %c0_165] : memref<1x64x512xf32, #tpu.memory_space<vmem>>, vector<1x64x512xf32>
    %175 = vector.shape_cast %174 : vector<1x64x512xf32> to vector<64x512xf32>
    %cst_166 = arith.constant dense<0.000000e+00> : vector<8x512xf32>
    %176 = tpu.matmul %173, %175, %cst_166 {dimension_numbers = #tpu.dot_dimension_numbers<[1], [0], [0], [1], [0, 0, 1, 1], [], []>} : vector<8x64xf32>, vector<64x512xf32>, vector<8x512xf32> -> vector<8x512xf32>
    %177 = arith.addf %170, %176 : vector<8x512xf32>
    %c0_167 = arith.constant 0 : index
    %c0_168 = arith.constant 0 : index
    %178 = vector.load %arg11[%c0_167, %c0_168] : memref<1x512xf32, #tpu.memory_space<vmem>>, vector<1x512xf32>
    %179 = vector.broadcast %178 : vector<1x512xf32> to vector<8x512xf32>
    %180 = arith.addf %177, %179 : vector<8x512xf32>
    %cst_169 = arith.constant 0.000000e+00 : f32
    %181 = vector.broadcast %cst_169 : f32 to vector<8x512xf32>
    %182 = arith.maximumf %180, %181 : vector<8x512xf32>
    %c0_170 = arith.constant 0 : index
    %c0_171 = arith.constant 0 : index
    %183 = vector.load %arg12[%c0_170, %c0_171] : memref<512x128xf32, #tpu.memory_space<vmem>>, vector<512x128xf32>
    %cst_172 = arith.constant dense<0.000000e+00> : vector<8x128xf32>
    %184 = tpu.matmul %182, %183, %cst_172 {dimension_numbers = #tpu.dot_dimension_numbers<[1], [0], [0], [1], [0, 0, 1, 1], [], []>} : vector<8x512xf32>, vector<512x128xf32>, vector<8x128xf32> -> vector<8x128xf32>
    %c0_173 = arith.constant 0 : index
    %c0_174 = arith.constant 0 : index
    %185 = vector.load %arg13[%c0_173, %c0_174] : memref<1x128xf32, #tpu.memory_space<vmem>>, vector<1x128xf32>
    %186 = vector.broadcast %185 : vector<1x128xf32> to vector<8x128xf32>
    %187 = arith.addf %184, %186 : vector<8x128xf32>
    %c0_175 = arith.constant 0 : index
    %c0_176 = arith.constant 0 : index
    %188 = vector.load %arg14[%c0_175, %c0_176] : memref<8x128xf32, #tpu.memory_space<vmem>>, vector<8x128xf32>
    tpu.vector_store %arg14[%c0_175, %c0_176], %187 {strides = array<i32>} : memref<8x128xf32, #tpu.memory_space<vmem>>, vector<8x128xf32>,
    return
  }
}

</mosaic_0001>

<llo_original>
// kernel: forward.1
$region0: #{forward.1}
  #allocation0 [shape = 'u32[]', space=smem, size = 0x4, offset = 0x4, fixed_abs, tag = 'smem constant byte address 0x4 - core index']
  #allocation1 [shape = 'u32[72,128]{1,0:T(1,128)}', space=vmem, size = 0x9000, scoped, tag = 'internal scratch']
  %s0 = inlined_call_operand.vmem [shape: f32[128,256], index: 0, kind: input, shape index: {}]
  %s1 = inlined_call_operand.vmem [shape: f32[256,32], index: 1, kind: input, shape index: {}]
  %s2 = inlined_call_operand.vmem [shape: f32[1,32], index: 2, kind: input, shape index: {}]
  %s3 = inlined_call_operand.vmem [shape: f32[16,24,128], index: 3, kind: input, shape index: {}]
  %s4 = inlined_call_operand.vmem [shape: f32[512,64], index: 4, kind: input, shape index: {}]
  %s5 = inlined_call_operand.vmem [shape: f32[1,64], index: 5, kind: input, shape index: {}]
  %s6 = inlined_call_operand.vmem [shape: f32[9,8,24], index: 6, kind: input, shape index: {}]
  %s7 = inlined_call_operand.vmem [shape: f32[576,64], index: 7, kind: input, shape index: {}]
  %s8 = inlined_call_operand.vmem [shape: f32[1,64], index: 8, kind: input, shape index: {}]
  %s9 = inlined_call_operand.vmem [shape: f32[1,8,8], index: 9, kind: input, shape index: {}]
  %s10 = inlined_call_operand.vmem [shape: f32[1,64,512], index: 10, kind: input, shape index: {}]
  %s11 = inlined_call_operand.vmem [shape: f32[1,512], index: 11, kind: input, shape index: {}]
  %s12 = inlined_call_operand.vmem [shape: f32[512,128], index: 12, kind: input, shape index: {}]
  %s13 = inlined_call_operand.vmem [shape: f32[1,128], index: 13, kind: input, shape index: {}]
  %s14 = inlined_call_operand.vmem [shape: f32[8,128], index: 14, kind: output, shape index: {}]
  %s15 = sld [smem:[#allocation0]]
  $region66: #{forward.1} parent=0
    _
  %s17 = ssub.s32 1, %s15
  %s18 = scalar_select 0, %s17, %s15
  // Predicated region
  $region2: #{forward.1} parent=0 // pred_check
    _
  $region3: #{forward.1} parent=0 // pred_check_branch
    %20 = sbr.rel (0) target = $region5
  $region4: #{forward.1} parent=0 // pred_region
    _
  $region5: #{forward.1} parent=0 // pred_fallthru
    _
  // Predicated region
  $region6: #{forward.1} parent=0 // pred_check
    _
  $region7: #{forward.1} parent=0 // pred_check_branch
    %22 = sbr.rel (0) target = $region9
  $region8: #{forward.1} parent=0 // pred_region
    _
  $region9: #{forward.1} parent=0 // pred_fallthru
    _
  // Predicated region
  $region10: #{forward.1} parent=0 // pred_check
    _
  $region11: #{forward.1} parent=0 // pred_check_branch
    %24 = sbr.rel (0) target = $region13
  $region12: #{forward.1} parent=0 // pred_region
    _
  $region13: #{forward.1} parent=0 // pred_fallthru
    _
  // Predicated region
  $region14: #{forward.1} parent=0 // pred_check
    _
  $region15: #{forward.1} parent=0 // pred_check_branch
    %26 = sbr.rel (0) target = $region17
  $region16: #{forward.1} parent=0 // pred_region
    _
  $region17: #{forward.1} parent=0 // pred_fallthru
    _
  // Predicated region
  $region18: #{forward.1} parent=0 // pred_check
    _
  $region19: #{forward.1} parent=0 // pred_check_branch
    %28 = sbr.rel (0) target = $region21
  $region20: #{forward.1} parent=0 // pred_region
    _
  $region21: #{forward.1} parent=0 // pred_fallthru
    _
  // Predicated region
  $region22: #{forward.1} parent=0 // pred_check
    _
  $region23: #{forward.1} parent=0 // pred_check_branch
    %30 = sbr.rel (0) target = $region25
  $region24: #{forward.1} parent=0 // pred_region
    _
  $region25: #{forward.1} parent=0 // pred_fallthru
    _
  // Predicated region
  $region26: #{forward.1} parent=0 // pred_check
    _
  $region27: #{forward.1} parent=0 // pred_check_branch
    %32 = sbr.rel (0) target = $region29
  $region28: #{forward.1} parent=0 // pred_region
    _
  $region29: #{forward.1} parent=0 // pred_fallthru
    _
  // Predicated region
  $region30: #{forward.1} parent=0 // pred_check
    _
  $region31: #{forward.1} parent=0 // pred_check_branch
    %34 = sbr.rel (0) target = $region33
  $region32: #{forward.1} parent=0 // pred_region
    _
  $region33: #{forward.1} parent=0 // pred_fallthru
    _
  // Predicated region
  $region34: #{forward.1} parent=0 // pred_check
    _
  $region35: #{forward.1} parent=0 // pred_check_branch
    %36 = sbr.rel (0) target = $region37
  $region36: #{forward.1} parent=0 // pred_region
    _
  $region37: #{forward.1} parent=0 // pred_fallthru
    _
  // Predicated region
  $region38: #{forward.1} parent=0 // pred_check
    _
  $region39: #{forward.1} parent=0 // pred_check_branch
    %38 = sbr.rel (0) target = $region41
  $region40: #{forward.1} parent=0 // pred_region
    _
  $region41: #{forward.1} parent=0 // pred_fallthru
    _
  // Predicated region
  $region42: #{forward.1} parent=0 // pred_check
    _
  $region43: #{forward.1} parent=0 // pred_check_branch
    %40 = sbr.rel (0) target = $region45
  $region44: #{forward.1} parent=0 // pred_region
    _
  $region45: #{forward.1} parent=0 // pred_fallthru
    _
  // Predicated region
  $region46: #{forward.1} parent=0 // pred_check
    _
  $region47: #{forward.1} parent=0 // pred_check_branch
    %42 = sbr.rel (0) target = $region49
  $region48: #{forward.1} parent=0 // pred_region
    _
  $region49: #{forward.1} parent=0 // pred_fallthru
    _
  // Predicated region
  $region50: #{forward.1} parent=0 // pred_check
    _
  $region51: #{forward.1} parent=0 // pred_check_branch
    %44 = sbr.rel (0) target = $region53
  $region52: #{forward.1} parent=0 // pred_region
    _
  $region53: #{forward.1} parent=0 // pred_fallthru
    _
  // Predicated region
  $region54: #{forward.1} parent=0 // pred_check
    _
  $region55: #{forward.1} parent=0 // pred_check_branch
    %46 = sbr.rel (0) target = $region57
  $region56: #{forward.1} parent=0 // pred_region
    _
  $region57: #{forward.1} parent=0 // pred_fallthru
    _
  %v47 = vld [vmem:[%s0] sm:$0xff]
  %v48 = vld [vmem:[%s0 + $0x8] sm:$0xff]
  %v49 = vld [vmem:[%s0 + $0x10] sm:$0xff]
  %v50 = vld [vmem:[%s0 + $0x18] sm:$0xff]
  %v51 = vld [vmem:[%s0 + $0x20] sm:$0xff]
  %v52 = vld [vmem:[%s0 + $0x28] sm:$0xff]
  %v53 = vld [vmem:[%s0 + $0x30] sm:$0xff]
  %v54 = vld [vmem:[%s0 + $0x38] sm:$0xff]
  %v55 = vld [vmem:[%s0 + $0x40] sm:$0xff]
  %v56 = vld [vmem:[%s0 + $0x48] sm:$0xff]
  %v57 = vld [vmem:[%s0 + $0x50] sm:$0xff]
  %v58 = vld [vmem:[%s0 + $0x58] sm:$0xff]
  %v59 = vld [vmem:[%s0 + $0x60] sm:$0xff]
  %v60 = vld [vmem:[%s0 + $0x68] sm:$0xff]
  %v61 = vld [vmem:[%s0 + $0x70] sm:$0xff]
  %v62 = vld [vmem:[%s0 + $0x78] sm:$0xff]
  %v63 = vld [vmem:[%s0 + $0x80] sm:$0xff]
  %v64 = vld [vmem:[%s0 + $0x88] sm:$0xff]
  %v65 = vld [vmem:[%s0 + $0x90] sm:$0xff]
  %v66 = vld [vmem:[%s0 + $0x98] sm:$0xff]
  %v67 = vld [vmem:[%s0 + $0xa0] sm:$0xff]
  %v68 = vld [vmem:[%s0 + $0xa8] sm:$0xff]
  %v69 = vld [vmem:[%s0 + $0xb0] sm:$0xff]
  %v70 = vld [vmem:[%s0 + $0xb8] sm:$0xff]
  %v71 = vld [vmem:[%s0 + $0xc0] sm:$0xff]
  %v72 = vld [vmem:[%s0 + $0xc8] sm:$0xff]
  %v73 = vld [vmem:[%s0 + $0xd0] sm:$0xff]
  %v74 = vld [vmem:[%s0 + $0xd8] sm:$0xff]
  %v75 = vld [vmem:[%s0 + $0xe0] sm:$0xff]
  %v76 = vld [vmem:[%s0 + $0xe8] sm:$0xff]
  %v77 = vld [vmem:[%s0 + $0xf0] sm:$0xff]
  %v78 = vld [vmem:[%s0 + $0xf8] sm:$0xff]
  %v79 = vld [vmem:[%s1] sm:$0xff]
  %v80 = vld [vmem:[%s1 + $0x8] sm:$0xff]
  %v81 = vld [vmem:[%s1 + $0x10] sm:$0xff]
  %v82 = vld [vmem:[%s1 + $0x18] sm:$0xff]
  %v83 = vld [vmem:[%s1 + $0x20] sm:$0xff]
  %v84 = vld [vmem:[%s1 + $0x28] sm:$0xff]
  %v85 = vld [vmem:[%s1 + $0x30] sm:$0xff]
  %v86 = vld [vmem:[%s1 + $0x38] sm:$0xff]
  %v87 = vld [vmem:[%s1 + $0x40] sm:$0xff]
  %v88 = vld [vmem:[%s1 + $0x48] sm:$0xff]
  %v89 = vld [vmem:[%s1 + $0x50] sm:$0xff]
  %v90 = vld [vmem:[%s1 + $0x58] sm:$0xff]
  %v91 = vld [vmem:[%s1 + $0x60] sm:$0xff]
  %v92 = vld [vmem:[%s1 + $0x68] sm:$0xff]
  %v93 = vld [vmem:[%s1 + $0x70] sm:$0xff]
  %v94 = vld [vmem:[%s1 + $0x78] sm:$0xff]
  %v95 = vld [vmem:[%s1 + $0x80] sm:$0xff]
  %v96 = vld [vmem:[%s1 + $0x88] sm:$0xff]
  %v97 = vld [vmem:[%s1 + $0x90] sm:$0xff]
  %v98 = vld [vmem:[%s1 + $0x98] sm:$0xff]
  %v99 = vld [vmem:[%s1 + $0xa0] sm:$0xff]
  %v100 = vld [vmem:[%s1 + $0xa8] sm:$0xff]
  %v101 = vld [vmem:[%s1 + $0xb0] sm:$0xff]
  %v102 = vld [vmem:[%s1 + $0xb8] sm:$0xff]
  %v103 = vld [vmem:[%s1 + $0xc0] sm:$0xff]
  %v104 = vld [vmem:[%s1 + $0xc8] sm:$0xff]
  %v105 = vld [vmem:[%s1 + $0xd0] sm:$0xff]
  %v106 = vld [vmem:[%s1 + $0xd8] sm:$0xff]
  %v107 = vld [vmem:[%s1 + $0xe0] sm:$0xff]
  %v108 = vld [vmem:[%s1 + $0xe8] sm:$0xff]
  %v109 = vld [vmem:[%s1 + $0xf0] sm:$0xff]
  %v110 = vld [vmem:[%s1 + $0xf8] sm:$0xff]
  %v111 = vld [vmem:[%s2] sm:$0x1]
  %v113 = vperm.slane %v111, 0
  %115 = vmatpush.msra.mxu0 %v94
  %116 = vmatpush.msra.mxu0 %v93
  %117 = vmatpush.msra.mxu0 %v92
  %118 = vmatpush.msra.mxu0 %v91
  %119 = vmatpush.msra.mxu0 %v90
  %120 = vmatpush.msra.mxu0 %v89
  %121 = vmatpush.msra.mxu0 %v88
  %122 = vmatpush.msra.mxu0 %v87
  %123 = vmatpush.msra.mxu0 %v86
  %124 = vmatpush.msra.mxu0 %v85
  %125 = vmatpush.msra.mxu0 %v84
  %126 = vmatpush.msra.mxu0 %v83
  %127 = vmatpush.msra.mxu0 %v82
  %128 = vmatpush.msra.mxu0 %v81
  %129 = vmatpush.msra.mxu0 %v80
  %130 = vmatpush.msra.mxu0 %v79
  %131 = vmatmul.f32.gmra.mxu0 %v47
  %v132 = vpop.f32.mrf.mxu0
  %v133 = vadd.f32 %v113, %v132
  %134 = vmatmul.f32.gmra.mxu0 %v49
  %v135 = vpop.f32.mrf.mxu0
  %v136 = vadd.f32 %v113, %v135
  %137 = vmatmul.f32.gmra.mxu0 %v51
  %v138 = vpop.f32.mrf.mxu0
  %v139 = vadd.f32 %v113, %v138
  %140 = vmatmul.f32.gmra.mxu0 %v53
  %v141 = vpop.f32.mrf.mxu0
  %v142 = vadd.f32 %v113, %v141
  %143 = vmatmul.f32.gmra.mxu0 %v55
  %v144 = vpop.f32.mrf.mxu0
  %v145 = vadd.f32 %v113, %v144
  %146 = vmatmul.f32.gmra.mxu0 %v57
  %v147 = vpop.f32.mrf.mxu0
  %v148 = vadd.f32 %v113, %v147
  %149 = vmatmul.f32.gmra.mxu0 %v59
  %v150 = vpop.f32.mrf.mxu0
  %v151 = vadd.f32 %v113, %v150
  %152 = vmatmul.f32.gmra.mxu0 %v61
  %v153 = vpop.f32.mrf.mxu0
  %v154 = vadd.f32 %v113, %v153
  %155 = vmatmul.f32.gmra.mxu0 %v63
  %v156 = vpop.f32.mrf.mxu0
  %v157 = vadd.f32 %v113, %v156
  %158 = vmatmul.f32.gmra.mxu0 %v65
  %v159 = vpop.f32.mrf.mxu0
  %v160 = vadd.f32 %v113, %v159
  %161 = vmatmul.f32.gmra.mxu0 %v67
  %v162 = vpop.f32.mrf.mxu0
  %v163 = vadd.f32 %v113, %v162
  %164 = vmatmul.f32.gmra.mxu0 %v69
  %v165 = vpop.f32.mrf.mxu0
  %v166 = vadd.f32 %v113, %v165
  %167 = vmatmul.f32.gmra.mxu0 %v71
  %v168 = vpop.f32.mrf.mxu0
  %v169 = vadd.f32 %v113, %v168
  %170 = vmatmul.f32.gmra.mxu0 %v73
  %v171 = vpop.f32.mrf.mxu0
  %v172 = vadd.f32 %v113, %v171
  %173 = vmatmul.f32.gmra.mxu0 %v75
  %v174 = vpop.f32.mrf.mxu0
  %v175 = vadd.f32 %v113, %v174
  %176 = vmatmul.f32.gmra.mxu0 %v77
  %v177 = vpop.f32.mrf.mxu0
  %v178 = vadd.f32 %v113, %v177
  %179 = vdwg.mxu0
  %180 = vmatpush.msra.mxu0 %v110
  %181 = vmatpush.msra.mxu0 %v109
  %182 = vmatpush.msra.mxu0 %v108
  %183 = vmatpush.msra.mxu0 %v107
  %184 = vmatpush.msra.mxu0 %v106
  %185 = vmatpush.msra.mxu0 %v105
  %186 = vmatpush.msra.mxu0 %v104
  %187 = vmatpush.msra.mxu0 %v103
  %188 = vmatpush.msra.mxu0 %v102
  %189 = vmatpush.msra.mxu0 %v101
  %190 = vmatpush.msra.mxu0 %v100
  %191 = vmatpush.msra.mxu0 %v99
  %192 = vmatpush.msra.mxu0 %v98
  %193 = vmatpush.msra.mxu0 %v97
  %194 = vmatpush.msra.mxu0 %v96
  %195 = vmatpush.msra.mxu0 %v95
  %196 = vmatmul.f32.gmra.mxu0 %v48
  %v197 = vpop.f32.mrf.mxu0
  %v198 = vadd.f32 %v133, %v197
  %199 = vmatmul.f32.gmra.mxu0 %v50
  %v200 = vpop.f32.mrf.mxu0
  %v201 = vadd.f32 %v136, %v200
  %202 = vmatmul.f32.gmra.mxu0 %v52
  %v203 = vpop.f32.mrf.mxu0
  %v204 = vadd.f32 %v139, %v203
  %205 = vmatmul.f32.gmra.mxu0 %v54
  %v206 = vpop.f32.mrf.mxu0
  %v207 = vadd.f32 %v142, %v206
  %208 = vmatmul.f32.gmra.mxu0 %v56
  %v209 = vpop.f32.mrf.mxu0
  %v210 = vadd.f32 %v145, %v209
  %211 = vmatmul.f32.gmra.mxu0 %v58
  %v212 = vpop.f32.mrf.mxu0
  %v213 = vadd.f32 %v148, %v212
  %214 = vmatmul.f32.gmra.mxu0 %v60
  %v215 = vpop.f32.mrf.mxu0
  %v216 = vadd.f32 %v151, %v215
  %217 = vmatmul.f32.gmra.mxu0 %v62
  %v218 = vpop.f32.mrf.mxu0
  %v219 = vadd.f32 %v154, %v218
  %220 = vmatmul.f32.gmra.mxu0 %v64
  %v221 = vpop.f32.mrf.mxu0
  %v222 = vadd.f32 %v157, %v221
  %223 = vmatmul.f32.gmra.mxu0 %v66
  %v224 = vpop.f32.mrf.mxu0
  %v225 = vadd.f32 %v160, %v224
  %226 = vmatmul.f32.gmra.mxu0 %v68
  %v227 = vpop.f32.mrf.mxu0
  %v228 = vadd.f32 %v163, %v227
  %229 = vmatmul.f32.gmra.mxu0 %v70
  %v230 = vpop.f32.mrf.mxu0
  %v231 = vadd.f32 %v166, %v230
  %232 = vmatmul.f32.gmra.mxu0 %v72
  %v233 = vpop.f32.mrf.mxu0
  %v234 = vadd.f32 %v169, %v233
  %235 = vmatmul.f32.gmra.mxu0 %v74
  %v236 = vpop.f32.mrf.mxu0
  %v237 = vadd.f32 %v172, %v236
  %238 = vmatmul.f32.gmra.mxu0 %v76
  %v239 = vpop.f32.mrf.mxu0
  %v240 = vadd.f32 %v175, %v239
  %241 = vmatmul.f32.gmra.mxu0 %v78
  %v242 = vpop.f32.mrf.mxu0
  %v243 = vadd.f32 %v178, %v242
  %244 = vdwg.mxu0
  %v245 = vmax.f32 %v198, 0.0
  %v246 = vmax.f32 %v201, 0.0
  %v247 = vmax.f32 %v204, 0.0
  %v248 = vmax.f32 %v207, 0.0
  %v249 = vmax.f32 %v210, 0.0
  %v250 = vmax.f32 %v213, 0.0
  %v251 = vmax.f32 %v216, 0.0
  %v252 = vmax.f32 %v219, 0.0
  %v253 = vmax.f32 %v222, 0.0
  %v254 = vmax.f32 %v225, 0.0
  %v255 = vmax.f32 %v228, 0.0
  %v256 = vmax.f32 %v231, 0.0
  %v257 = vmax.f32 %v234, 0.0
  %v258 = vmax.f32 %v237, 0.0
  %v259 = vmax.f32 %v240, 0.0
  %v260 = vmax.f32 %v243, 0.0
  %v261 = vld [vmem:[%s3] sm:$0xff]
  %v262 = vld [vmem:[%s3 + $0x8] sm:$0xff]
  %v263 = vld [vmem:[%s3 + $0x10] sm:$0xff]
  %264 = vmatpush.msra.mxu0 %v260
  %265 = vmatpush.msra.mxu0 %v259
  %266 = vmatpush.msra.mxu0 %v258
  %267 = vmatpush.msra.mxu0 %v257
  %268 = vmatpush.msra.mxu0 %v256
  %269 = vmatpush.msra.mxu0 %v255
  %270 = vmatpush.msra.mxu0 %v254
  %271 = vmatpush.msra.mxu0 %v253
  %272 = vmatpush.msra.mxu0 %v252
  %273 = vmatpush.msra.mxu0 %v251
  %274 = vmatpush.msra.mxu0 %v250
  %275 = vmatpush.msra.mxu0 %v249
  %276 = vmatpush.msra.mxu0 %v248
  %277 = vmatpush.msra.mxu0 %v247
  %278 = vmatpush.msra.mxu0 %v246
  %279 = vmatpush.msra.mxu0 %v245
  %280 = vmatmul.f32.gmra.mxu0 %v261
  %v281 = vpop.f32.mrf.mxu0
  %v282 = vadd.f32 0.0, %v281
  %283 = vmatmul.f32.gmra.mxu0 %v262
  %v284 = vpop.f32.mrf.mxu0
  %v285 = vadd.f32 0.0, %v284
  %286 = vmatmul.f32.gmra.mxu0 %v263
  %v287 = vpop.f32.mrf.mxu0
  %v288 = vadd.f32 0.0, %v287
  %289 = vdwg.mxu0
  %v290 = vld [vmem:[%s4] sm:$0xff]
  %v291 = vld [vmem:[%s4 + $0x8] sm:$0xff]
  %v292 = vld [vmem:[%s4 + $0x10] sm:$0xff]
  %v293 = vld [vmem:[%s4 + $0x18] sm:$0xff]
  %s294 = scalar_lea.vmem %s3, 24
  %v295 = vld [vmem:[%s294] sm:$0xff]
  %v296 = vld [vmem:[%s294 + $0x8] sm:$0xff]
  %v297 = vld [vmem:[%s294 + $0x10] sm:$0xff]
  %298 = vmatpush.msra.mxu0 %v260
  %299 = vmatpush.msra.mxu0 %v259
  %300 = vmatpush.msra.mxu0 %v258
  %301 = vmatpush.msra.mxu0 %v257
  %302 = vmatpush.msra.mxu0 %v256
  %303 = vmatpush.msra.mxu0 %v255
  %304 = vmatpush.msra.mxu0 %v254
  %305 = vmatpush.msra.mxu0 %v253
  %306 = vmatpush.msra.mxu0 %v252
  %307 = vmatpush.msra.mxu0 %v251
  %308 = vmatpush.msra.mxu0 %v250
  %309 = vmatpush.msra.mxu0 %v249
  %310 = vmatpush.msra.mxu0 %v248
  %311 = vmatpush.msra.mxu0 %v247
  %312 = vmatpush.msra.mxu0 %v246
  %313 = vmatpush.msra.mxu0 %v245
  %314 = vmatmul.f32.gmra.mxu0 %v295
  %v315 = vpop.f32.mrf.mxu0
  %v316 = vadd.f32 0.0, %v315
  %317 = vmatmul.f32.gmra.mxu0 %v296
  %v318 = vpop.f32.mrf.mxu0
  %v319 = vadd.f32 0.0, %v318
  %320 = vmatmul.f32.gmra.mxu0 %v297
  %v321 = vpop.f32.mrf.mxu0
  %v322 = vadd.f32 0.0, %v321
  %323 = vdwg.mxu0
  %v324 = vld [vmem:[%s4 + $0x20] sm:$0xff]
  %v325 = vld [vmem:[%s4 + $0x28] sm:$0xff]
  %v326 = vld [vmem:[%s4 + $0x30] sm:$0xff]
  %v327 = vld [vmem:[%s4 + $0x38] sm:$0xff]
  %vm328 = vcmask 261120
  %v330 = vsel %vm328, %v316, 0
  %v333 = vsel %vm328, %v319, 0
  %v336 = vsel %vm328, %v322, 0
  %338 = vmatpush.msra.mxu0 0.0
  %339 = vmatpush.msra.mxu0 0.0
  %340 = vmatpush.msra.mxu0 0.0
  %341 = vmatpush.msra.mxu0 0.0
  %342 = vmatpush.msra.mxu0 0.0
  %343 = vmatpush.msra.mxu0 0.0
  %344 = vmatpush.msra.mxu0 0.0
  %345 = vmatpush.msra.mxu0 0.0
  %346 = vmatpush.msra.mxu0 0.0
  %347 = vmatpush.msra.mxu0 0.0
  %348 = vmatpush.msra.mxu0 0.0
  %349 = vmatpush.msra.mxu0 0.0
  %350 = vmatpush.msra.mxu0 %v327
  %351 = vmatpush.msra.mxu0 %v326
  %352 = vmatpush.msra.mxu0 %v325
  %353 = vmatpush.msra.mxu0 %v324
  %354 = vmatmul.f32.gmra.mxu0 %v330
  %v355 = vpop.f32.mrf.mxu0
  %v356 = vadd.f32 0.0, %v355
  %357 = vmatmul.f32.gmra.mxu0 %v333
  %v358 = vpop.f32.mrf.mxu0
  %v359 = vadd.f32 0.0, %v358
  %360 = vmatmul.f32.gmra.mxu0 %v336
  %v361 = vpop.f32.mrf.mxu0
  %v362 = vadd.f32 0.0, %v361
  %363 = vdwg.mxu0
  %v365 = vsel %vm328, %v282, 0
  %v368 = vsel %vm328, %v285, 0
  %v371 = vsel %vm328, %v288, 0
  %373 = vmatpush.msra.mxu0 0.0
  %374 = vmatpush.msra.mxu0 0.0
  %375 = vmatpush.msra.mxu0 0.0
  %376 = vmatpush.msra.mxu0 0.0
  %377 = vmatpush.msra.mxu0 0.0
  %378 = vmatpush.msra.mxu0 0.0
  %379 = vmatpush.msra.mxu0 0.0
  %380 = vmatpush.msra.mxu0 0.0
  %381 = vmatpush.msra.mxu0 0.0
  %382 = vmatpush.msra.mxu0 0.0
  %383 = vmatpush.msra.mxu0 0.0
  %384 = vmatpush.msra.mxu0 0.0
  %385 = vmatpush.msra.mxu0 %v293
  %386 = vmatpush.msra.mxu0 %v292
  %387 = vmatpush.msra.mxu0 %v291
  %388 = vmatpush.msra.mxu0 %v290
  %389 = vmatmul.f32.gmra.mxu0 %v365
  %v390 = vpop.f32.mrf.mxu0
  %v391 = vadd.f32 %v356, %v390
  %392 = vmatmul.f32.gmra.mxu0 %v368
  %v393 = vpop.f32.mrf.mxu0
  %v394 = vadd.f32 %v359, %v393
  %395 = vmatmul.f32.gmra.mxu0 %v371
  %v396 = vpop.f32.mrf.mxu0
  %v397 = vadd.f32 %v362, %v396
  %398 = vdwg.mxu0
  %s399 = scalar_lea.vmem %s3, 48
  %v400 = vld [vmem:[%s399] sm:$0xff]
  %v401 = vld [vmem:[%s399 + $0x8] sm:$0xff]
  %v402 = vld [vmem:[%s399 + $0x10] sm:$0xff]
  %403 = vmatpush.msra.mxu0 %v260
  %404 = vmatpush.msra.mxu0 %v259
  %405 = vmatpush.msra.mxu0 %v258
  %406 = vmatpush.msra.mxu0 %v257
  %407 = vmatpush.msra.mxu0 %v256
  %408 = vmatpush.msra.mxu0 %v255
  %409 = vmatpush.msra.mxu0 %v254
  %410 = vmatpush.msra.mxu0 %v253
  %411 = vmatpush.msra.mxu0 %v252
  %412 = vmatpush.msra.mxu0 %v251
  %413 = vmatpush.msra.mxu0 %v250
  %414 = vmatpush.msra.mxu0 %v249
  %415 = vmatpush.msra.mxu0 %v248
  %416 = vmatpush.msra.mxu0 %v247
  %417 = vmatpush.msra.mxu0 %v246
  %418 = vmatpush.msra.mxu0 %v245
  %419 = vmatmul.f32.gmra.mxu0 %v400
  %v420 = vpop.f32.mrf.mxu0
  %v421 = vadd.f32 0.0, %v420
  %422 = vmatmul.f32.gmra.mxu0 %v401
  %v423 = vpop.f32.mrf.mxu0
  %v424 = vadd.f32 0.0, %v423
  %425 = vmatmul.f32.gmra.mxu0 %v402
  %v426 = vpop.f32.mrf.mxu0
  %v427 = vadd.f32 0.0, %v426
  %428 = vdwg.mxu0
  %v429 = vld [vmem:[%s4 + $0x40] sm:$0xff]
  %v430 = vld [vmem:[%s4 + $0x48] sm:$0xff]
  %v431 = vld [vmem:[%s4 + $0x50] sm:$0xff]
  %v432 = vld [vmem:[%s4 + $0x58] sm:$0xff]
  %v434 = vsel %vm328, %v421, 0
  %v437 = vsel %vm328, %v424, 0
  %v440 = vsel %vm328, %v427, 0
  %442 = vmatpush.msra.mxu0 0.0
  %443 = vmatpush.msra.mxu0 0.0
  %444 = vmatpush.msra.mxu0 0.0
  %445 = vmatpush.msra.mxu0 0.0
  %446 = vmatpush.msra.mxu0 0.0
  %447 = vmatpush.msra.mxu0 0.0
  %448 = vmatpush.msra.mxu0 0.0
  %449 = vmatpush.msra.mxu0 0.0
  %450 = vmatpush.msra.mxu0 0.0
  %451 = vmatpush.msra.mxu0 0.0
  %452 = vmatpush.msra.mxu0 0.0
  %453 = vmatpush.msra.mxu0 0.0
  %454 = vmatpush.msra.mxu0 %v432
  %455 = vmatpush.msra.mxu0 %v431
  %456 = vmatpush.msra.mxu0 %v430
  %457 = vmatpush.msra.mxu0 %v429
  %458 = vmatmul.f32.gmra.mxu0 %v434
  %v459 = vpop.f32.mrf.mxu0
  %v460 = vadd.f32 0.0, %v459
  %461 = vmatmul.f32.gmra.mxu0 %v437
  %v462 = vpop.f32.mrf.mxu0
  %v463 = vadd.f32 0.0, %v462
  %464 = vmatmul.f32.gmra.mxu0 %v440
  %v465 = vpop.f32.mrf.mxu0
  %v466 = vadd.f32 0.0, %v465
  %467 = vdwg.mxu0
  %v468 = vadd.f32 %v391, %v460
  %v469 = vadd.f32 %v394, %v463
  %v470 = vadd.f32 %v397, %v466
  %s471 = scalar_lea.vmem %s3, 72
  %v472 = vld [vmem:[%s471] sm:$0xff]
  %v473 = vld [vmem:[%s471 + $0x8] sm:$0xff]
  %v474 = vld [vmem:[%s471 + $0x10] sm:$0xff]
  %475 = vmatpush.msra.mxu0 %v260
  %476 = vmatpush.msra.mxu0 %v259
  %477 = vmatpush.msra.mxu0 %v258
  %478 = vmatpush.msra.mxu0 %v257
  %479 = vmatpush.msra.mxu0 %v256
  %480 = vmatpush.msra.mxu0 %v255
  %481 = vmatpush.msra.mxu0 %v254
  %482 = vmatpush.msra.mxu0 %v253
  %483 = vmatpush.msra.mxu0 %v252
  %484 = vmatpush.msra.mxu0 %v251
  %485 = vmatpush.msra.mxu0 %v250
  %486 = vmatpush.msra.mxu0 %v249
  %487 = vmatpush.msra.mxu0 %v248
  %488 = vmatpush.msra.mxu0 %v247
  %489 = vmatpush.msra.mxu0 %v246
  %490 = vmatpush.msra.mxu0 %v245
  %491 = vmatmul.f32.gmra.mxu0 %v472
  %v492 = vpop.f32.mrf.mxu0
  %v493 = vadd.f32 0.0, %v492
  %494 = vmatmul.f32.gmra.mxu0 %v473
  %v495 = vpop.f32.mrf.mxu0
  %v496 = vadd.f32 0.0, %v495
  %497 = vmatmul.f32.gmra.mxu0 %v474
  %v498 = vpop.f32.mrf.mxu0
  %v499 = vadd.f32 0.0, %v498
  %500 = vdwg.mxu0
  %v501 = vld [vmem:[%s4 + $0x60] sm:$0xff]
  %v502 = vld [vmem:[%s4 + $0x68] sm:$0xff]
  %v503 = vld [vmem:[%s4 + $0x70] sm:$0xff]
  %v504 = vld [vmem:[%s4 + $0x78] sm:$0xff]
  %v506 = vsel %vm328, %v493, 0
  %v509 = vsel %vm328, %v496, 0
  %v512 = vsel %vm328, %v499, 0
  %514 = vmatpush.msra.mxu0 0.0
  %515 = vmatpush.msra.mxu0 0.0
  %516 = vmatpush.msra.mxu0 0.0
  %517 = vmatpush.msra.mxu0 0.0
  %518 = vmatpush.msra.mxu0 0.0
  %519 = vmatpush.msra.mxu0 0.0
  %520 = vmatpush.msra.mxu0 0.0
  %521 = vmatpush.msra.mxu0 0.0
  %522 = vmatpush.msra.mxu0 0.0
  %523 = vmatpush.msra.mxu0 0.0
  %524 = vmatpush.msra.mxu0 0.0
  %525 = vmatpush.msra.mxu0 0.0
  %526 = vmatpush.msra.mxu0 %v504
  %527 = vmatpush.msra.mxu0 %v503
  %528 = vmatpush.msra.mxu0 %v502
  %529 = vmatpush.msra.mxu0 %v501
  %530 = vmatmul.f32.gmra.mxu0 %v506
  %v531 = vpop.f32.mrf.mxu0
  %v532 = vadd.f32 0.0, %v531
  %533 = vmatmul.f32.gmra.mxu0 %v509
  %v534 = vpop.f32.mrf.mxu0
  %v535 = vadd.f32 0.0, %v534
  %536 = vmatmul.f32.gmra.mxu0 %v512
  %v537 = vpop.f32.mrf.mxu0
  %v538 = vadd.f32 0.0, %v537
  %539 = vdwg.mxu0
  %v540 = vadd.f32 %v468, %v532
  %v541 = vadd.f32 %v469, %v535
  %v542 = vadd.f32 %v470, %v538
  %s543 = scalar_lea.vmem %s3, 96
  %v544 = vld [vmem:[%s543] sm:$0xff]
  %v545 = vld [vmem:[%s543 + $0x8] sm:$0xff]
  %v546 = vld [vmem:[%s543 + $0x10] sm:$0xff]
  %547 = vmatpush.msra.mxu0 %v260
  %548 = vmatpush.msra.mxu0 %v259
  %549 = vmatpush.msra.mxu0 %v258
  %550 = vmatpush.msra.mxu0 %v257
  %551 = vmatpush.msra.mxu0 %v256
  %552 = vmatpush.msra.mxu0 %v255
  %553 = vmatpush.msra.mxu0 %v254
  %554 = vmatpush.msra.mxu0 %v253
  %555 = vmatpush.msra.mxu0 %v252
  %556 = vmatpush.msra.mxu0 %v251
  %557 = vmatpush.msra.mxu0 %v250
  %558 = vmatpush.msra.mxu0 %v249
  %559 = vmatpush.msra.mxu0 %v248
  %560 = vmatpush.msra.mxu0 %v247
  %561 = vmatpush.msra.mxu0 %v246
  %562 = vmatpush.msra.mxu0 %v245
  %563 = vmatmul.f32.gmra.mxu0 %v544
  %v564 = vpop.f32.mrf.mxu0
  %v565 = vadd.f32 0.0, %v564
  %566 = vmatmul.f32.gmra.mxu0 %v545
  %v567 = vpop.f32.mrf.mxu0
  %v568 = vadd.f32 0.0, %v567
  %569 = vmatmul.f32.gmra.mxu0 %v546
  %v570 = vpop.f32.mrf.mxu0
  %v571 = vadd.f32 0.0, %v570
  %572 = vdwg.mxu0
  %v573 = vld [vmem:[%s4 + $0x80] sm:$0xff]
  %v574 = vld [vmem:[%s4 + $0x88] sm:$0xff]
  %v575 = vld [vmem:[%s4 + $0x90] sm:$0xff]
  %v576 = vld [vmem:[%s4 + $0x98] sm:$0xff]
  %v578 = vsel %vm328, %v565, 0
  %v581 = vsel %vm328, %v568, 0
  %v584 = vsel %vm328, %v571, 0
  %586 = vmatpush.msra.mxu0 0.0
  %587 = vmatpush.msra.mxu0 0.0
  %588 = vmatpush.msra.mxu0 0.0
  %589 = vmatpush.msra.mxu0 0.0
  %590 = vmatpush.msra.mxu0 0.0
  %591 = vmatpush.msra.mxu0 0.0
  %592 = vmatpush.msra.mxu0 0.0
  %593 = vmatpush.msra.mxu0 0.0
  %594 = vmatpush.msra.mxu0 0.0
  %595 = vmatpush.msra.mxu0 0.0
  %596 = vmatpush.msra.mxu0 0.0
  %597 = vmatpush.msra.mxu0 0.0
  %598 = vmatpush.msra.mxu0 %v576
  %599 = vmatpush.msra.mxu0 %v575
  %600 = vmatpush.msra.mxu0 %v574
  %601 = vmatpush.msra.mxu0 %v573
  %602 = vmatmul.f32.gmra.mxu0 %v578
  %v603 = vpop.f32.mrf.mxu0
  %v604 = vadd.f32 0.0, %v603
  %605 = vmatmul.f32.gmra.mxu0 %v581
  %v606 = vpop.f32.mrf.mxu0
  %v607 = vadd.f32 0.0, %v606
  %608 = vmatmul.f32.gmra.mxu0 %v584
  %v609 = vpop.f32.mrf.mxu0
  %v610 = vadd.f32 0.0, %v609
  %611 = vdwg.mxu0
  %v612 = vadd.f32 %v540, %v604
  %v613 = vadd.f32 %v541, %v607
  %v614 = vadd.f32 %v542, %v610
  %s615 = scalar_lea.vmem %s3, 120
  %v616 = vld [vmem:[%s615] sm:$0xff]
  %v617 = vld [vmem:[%s615 + $0x8] sm:$0xff]
  %v618 = vld [vmem:[%s615 + $0x10] sm:$0xff]
  %619 = vmatpush.msra.mxu0 %v260
  %620 = vmatpush.msra.mxu0 %v259
  %621 = vmatpush.msra.mxu0 %v258
  %622 = vmatpush.msra.mxu0 %v257
  %623 = vmatpush.msra.mxu0 %v256
  %624 = vmatpush.msra.mxu0 %v255
  %625 = vmatpush.msra.mxu0 %v254
  %626 = vmatpush.msra.mxu0 %v253
  %627 = vmatpush.msra.mxu0 %v252
  %628 = vmatpush.msra.mxu0 %v251
  %629 = vmatpush.msra.mxu0 %v250
  %630 = vmatpush.msra.mxu0 %v249
  %631 = vmatpush.msra.mxu0 %v248
  %632 = vmatpush.msra.mxu0 %v247
  %633 = vmatpush.msra.mxu0 %v246
  %634 = vmatpush.msra.mxu0 %v245
  %635 = vmatmul.f32.gmra.mxu0 %v616
  %v636 = vpop.f32.mrf.mxu0
  %v637 = vadd.f32 0.0, %v636
  %638 = vmatmul.f32.gmra.mxu0 %v617
  %v639 = vpop.f32.mrf.mxu0
  %v640 = vadd.f32 0.0, %v639
  %641 = vmatmul.f32.gmra.mxu0 %v618
  %v642 = vpop.f32.mrf.mxu0
  %v643 = vadd.f32 0.0, %v642
  %644 = vdwg.mxu0
  %v645 = vld [vmem:[%s4 + $0xa0] sm:$0xff]
  %v646 = vld [vmem:[%s4 + $0xa8] sm:$0xff]
  %v647 = vld [vmem:[%s4 + $0xb0] sm:$0xff]
  %v648 = vld [vmem:[%s4 + $0xb8] sm:$0xff]
  %v650 = vsel %vm328, %v637, 0
  %v653 = vsel %vm328, %v640, 0
  %v656 = vsel %vm328, %v643, 0
  %658 = vmatpush.msra.mxu0 0.0
  %659 = vmatpush.msra.mxu0 0.0
  %660 = vmatpush.msra.mxu0 0.0
  %661 = vmatpush.msra.mxu0 0.0
  %662 = vmatpush.msra.mxu0 0.0
  %663 = vmatpush.msra.mxu0 0.0
  %664 = vmatpush.msra.mxu0 0.0
  %665 = vmatpush.msra.mxu0 0.0
  %666 = vmatpush.msra.mxu0 0.0
  %667 = vmatpush.msra.mxu0 0.0
  %668 = vmatpush.msra.mxu0 0.0
  %669 = vmatpush.msra.mxu0 0.0
  %670 = vmatpush.msra.mxu0 %v648
  %671 = vmatpush.msra.mxu0 %v647
  %672 = vmatpush.msra.mxu0 %v646
  %673 = vmatpush.msra.mxu0 %v645
  %674 = vmatmul.f32.gmra.mxu0 %v650
  %v675 = vpop.f32.mrf.mxu0
  %v676 = vadd.f32 0.0, %v675
  %677 = vmatmul.f32.gmra.mxu0 %v653
  %v678 = vpop.f32.mrf.mxu0
  %v679 = vadd.f32 0.0, %v678
  %680 = vmatmul.f32.gmra.mxu0 %v656
  %v681 = vpop.f32.mrf.mxu0
  %v682 = vadd.f32 0.0, %v681
  %683 = vdwg.mxu0
  %v684 = vadd.f32 %v612, %v676
  %v685 = vadd.f32 %v613, %v679
  %v686 = vadd.f32 %v614, %v682
  %s687 = scalar_lea.vmem %s3, 144
  %v688 = vld [vmem:[%s687] sm:$0xff]
  %v689 = vld [vmem:[%s687 + $0x8] sm:$0xff]
  %v690 = vld [vmem:[%s687 + $0x10] sm:$0xff]
  %691 = vmatpush.msra.mxu0 %v260
  %692 = vmatpush.msra.mxu0 %v259
  %693 = vmatpush.msra.mxu0 %v258
  %694 = vmatpush.msra.mxu0 %v257
  %695 = vmatpush.msra.mxu0 %v256
  %696 = vmatpush.msra.mxu0 %v255
  %697 = vmatpush.msra.mxu0 %v254
  %698 = vmatpush.msra.mxu0 %v253
  %699 = vmatpush.msra.mxu0 %v252
  %700 = vmatpush.msra.mxu0 %v251
  %701 = vmatpush.msra.mxu0 %v250
  %702 = vmatpush.msra.mxu0 %v249
  %703 = vmatpush.msra.mxu0 %v248
  %704 = vmatpush.msra.mxu0 %v247
  %705 = vmatpush.msra.mxu0 %v246
  %706 = vmatpush.msra.mxu0 %v245
  %707 = vmatmul.f32.gmra.mxu0 %v688
  %v708 = vpop.f32.mrf.mxu0
  %v709 = vadd.f32 0.0, %v708
  %710 = vmatmul.f32.gmra.mxu0 %v689
  %v711 = vpop.f32.mrf.mxu0
  %v712 = vadd.f32 0.0, %v711
  %713 = vmatmul.f32.gmra.mxu0 %v690
  %v714 = vpop.f32.mrf.mxu0
  %v715 = vadd.f32 0.0, %v714
  %716 = vdwg.mxu0
  %v717 = vld [vmem:[%s4 + $0xc0] sm:$0xff]
  %v718 = vld [vmem:[%s4 + $0xc8] sm:$0xff]
  %v719 = vld [vmem:[%s4 + $0xd0] sm:$0xff]
  %v720 = vld [vmem:[%s4 + $0xd8] sm:$0xff]
  %v722 = vsel %vm328, %v709, 0
  %v725 = vsel %vm328, %v712, 0
  %v728 = vsel %vm328, %v715, 0
  %730 = vmatpush.msra.mxu0 0.0
  %731 = vmatpush.msra.mxu0 0.0
  %732 = vmatpush.msra.mxu0 0.0
  %733 = vmatpush.msra.mxu0 0.0
  %734 = vmatpush.msra.mxu0 0.0
  %735 = vmatpush.msra.mxu0 0.0
  %736 = vmatpush.msra.mxu0 0.0
  %737 = vmatpush.msra.mxu0 0.0
  %738 = vmatpush.msra.mxu0 0.0
  %739 = vmatpush.msra.mxu0 0.0
  %740 = vmatpush.msra.mxu0 0.0
  %741 = vmatpush.msra.mxu0 0.0
  %742 = vmatpush.msra.mxu0 %v720
  %743 = vmatpush.msra.mxu0 %v719
  %744 = vmatpush.msra.mxu0 %v718
  %745 = vmatpush.msra.mxu0 %v717
  %746 = vmatmul.f32.gmra.mxu0 %v722
  %v747 = vpop.f32.mrf.mxu0
  %v748 = vadd.f32 0.0, %v747
  %749 = vmatmul.f32.gmra.mxu0 %v725
  %v750 = vpop.f32.mrf.mxu0
  %v751 = vadd.f32 0.0, %v750
  %752 = vmatmul.f32.gmra.mxu0 %v728
  %v753 = vpop.f32.mrf.mxu0
  %v754 = vadd.f32 0.0, %v753
  %755 = vdwg.mxu0
  %v756 = vadd.f32 %v684, %v748
  %v757 = vadd.f32 %v685, %v751
  %v758 = vadd.f32 %v686, %v754
  %s759 = scalar_lea.vmem %s3, 168
  %v760 = vld [vmem:[%s759] sm:$0xff]
  %v761 = vld [vmem:[%s759 + $0x8] sm:$0xff]
  %v762 = vld [vmem:[%s759 + $0x10] sm:$0xff]
  %763 = vmatpush.msra.mxu0 %v260
  %764 = vmatpush.msra.mxu0 %v259
  %765 = vmatpush.msra.mxu0 %v258
  %766 = vmatpush.msra.mxu0 %v257
  %767 = vmatpush.msra.mxu0 %v256
  %768 = vmatpush.msra.mxu0 %v255
  %769 = vmatpush.msra.mxu0 %v254
  %770 = vmatpush.msra.mxu0 %v253
  %771 = vmatpush.msra.mxu0 %v252
  %772 = vmatpush.msra.mxu0 %v251
  %773 = vmatpush.msra.mxu0 %v250
  %774 = vmatpush.msra.mxu0 %v249
  %775 = vmatpush.msra.mxu0 %v248
  %776 = vmatpush.msra.mxu0 %v247
  %777 = vmatpush.msra.mxu0 %v246
  %778 = vmatpush.msra.mxu0 %v245
  %779 = vmatmul.f32.gmra.mxu0 %v760
  %v780 = vpop.f32.mrf.mxu0
  %v781 = vadd.f32 0.0, %v780
  %782 = vmatmul.f32.gmra.mxu0 %v761
  %v783 = vpop.f32.mrf.mxu0
  %v784 = vadd.f32 0.0, %v783
  %785 = vmatmul.f32.gmra.mxu0 %v762
  %v786 = vpop.f32.mrf.mxu0
  %v787 = vadd.f32 0.0, %v786
  %788 = vdwg.mxu0
  %v789 = vld [vmem:[%s4 + $0xe0] sm:$0xff]
  %v790 = vld [vmem:[%s4 + $0xe8] sm:$0xff]
  %v791 = vld [vmem:[%s4 + $0xf0] sm:$0xff]
  %v792 = vld [vmem:[%s4 + $0xf8] sm:$0xff]
  %v794 = vsel %vm328, %v781, 0
  %v797 = vsel %vm328, %v784, 0
  %v800 = vsel %vm328, %v787, 0
  %802 = vmatpush.msra.mxu0 0.0
  %803 = vmatpush.msra.mxu0 0.0
  %804 = vmatpush.msra.mxu0 0.0
  %805 = vmatpush.msra.mxu0 0.0
  %806 = vmatpush.msra.mxu0 0.0
  %807 = vmatpush.msra.mxu0 0.0
  %808 = vmatpush.msra.mxu0 0.0
  %809 = vmatpush.msra.mxu0 0.0
  %810 = vmatpush.msra.mxu0 0.0
  %811 = vmatpush.msra.mxu0 0.0
  %812 = vmatpush.msra.mxu0 0.0
  %813 = vmatpush.msra.mxu0 0.0
  %814 = vmatpush.msra.mxu0 %v792
  %815 = vmatpush.msra.mxu0 %v791
  %816 = vmatpush.msra.mxu0 %v790
  %817 = vmatpush.msra.mxu0 %v789
  %818 = vmatmul.f32.gmra.mxu0 %v794
  %v819 = vpop.f32.mrf.mxu0
  %v820 = vadd.f32 0.0, %v819
  %821 = vmatmul.f32.gmra.mxu0 %v797
  %v822 = vpop.f32.mrf.mxu0
  %v823 = vadd.f32 0.0, %v822
  %824 = vmatmul.f32.gmra.mxu0 %v800
  %v825 = vpop.f32.mrf.mxu0
  %v826 = vadd.f32 0.0, %v825
  %827 = vdwg.mxu0
  %v828 = vadd.f32 %v756, %v820
  %v829 = vadd.f32 %v757, %v823
  %v830 = vadd.f32 %v758, %v826
  %s831 = scalar_lea.vmem %s3, 192
  %v832 = vld [vmem:[%s831] sm:$0xff]
  %v833 = vld [vmem:[%s831 + $0x8] sm:$0xff]
  %v834 = vld [vmem:[%s831 + $0x10] sm:$0xff]
  %835 = vmatpush.msra.mxu0 %v260
  %836 = vmatpush.msra.mxu0 %v259
  %837 = vmatpush.msra.mxu0 %v258
  %838 = vmatpush.msra.mxu0 %v257
  %839 = vmatpush.msra.mxu0 %v256
  %840 = vmatpush.msra.mxu0 %v255
  %841 = vmatpush.msra.mxu0 %v254
  %842 = vmatpush.msra.mxu0 %v253
  %843 = vmatpush.msra.mxu0 %v252
  %844 = vmatpush.msra.mxu0 %v251
  %845 = vmatpush.msra.mxu0 %v250
  %846 = vmatpush.msra.mxu0 %v249
  %847 = vmatpush.msra.mxu0 %v248
  %848 = vmatpush.msra.mxu0 %v247
  %849 = vmatpush.msra.mxu0 %v246
  %850 = vmatpush.msra.mxu0 %v245
  %851 = vmatmul.f32.gmra.mxu0 %v832
  %v852 = vpop.f32.mrf.mxu0
  %v853 = vadd.f32 0.0, %v852
  %854 = vmatmul.f32.gmra.mxu0 %v833
  %v855 = vpop.f32.mrf.mxu0
  %v856 = vadd.f32 0.0, %v855
  %857 = vmatmul.f32.gmra.mxu0 %v834
  %v858 = vpop.f32.mrf.mxu0
  %v859 = vadd.f32 0.0, %v858
  %860 = vdwg.mxu0
  %v861 = vld [vmem:[%s4 + $0x100] sm:$0xff]
  %v862 = vld [vmem:[%s4 + $0x108] sm:$0xff]
  %v863 = vld [vmem:[%s4 + $0x110] sm:$0xff]
  %v864 = vld [vmem:[%s4 + $0x118] sm:$0xff]
  %v866 = vsel %vm328, %v853, 0
  %v869 = vsel %vm328, %v856, 0
  %v872 = vsel %vm328, %v859, 0
  %874 = vmatpush.msra.mxu0 0.0
  %875 = vmatpush.msra.mxu0 0.0
  %876 = vmatpush.msra.mxu0 0.0
  %877 = vmatpush.msra.mxu0 0.0
  %878 = vmatpush.msra.mxu0 0.0
  %879 = vmatpush.msra.mxu0 0.0
  %880 = vmatpush.msra.mxu0 0.0
  %881 = vmatpush.msra.mxu0 0.0
  %882 = vmatpush.msra.mxu0 0.0
  %883 = vmatpush.msra.mxu0 0.0
  %884 = vmatpush.msra.mxu0 0.0
  %885 = vmatpush.msra.mxu0 0.0
  %886 = vmatpush.msra.mxu0 %v864
  %887 = vmatpush.msra.mxu0 %v863
  %888 = vmatpush.msra.mxu0 %v862
  %889 = vmatpush.msra.mxu0 %v861
  %890 = vmatmul.f32.gmra.mxu0 %v866
  %v891 = vpop.f32.mrf.mxu0
  %v892 = vadd.f32 0.0, %v891
  %893 = vmatmul.f32.gmra.mxu0 %v869
  %v894 = vpop.f32.mrf.mxu0
  %v895 = vadd.f32 0.0, %v894
  %896 = vmatmul.f32.gmra.mxu0 %v872
  %v897 = vpop.f32.mrf.mxu0
  %v898 = vadd.f32 0.0, %v897
  %899 = vdwg.mxu0
  %v900 = vadd.f32 %v828, %v892
  %v901 = vadd.f32 %v829, %v895
  %v902 = vadd.f32 %v830, %v898
  %s903 = scalar_lea.vmem %s3, 216
  %v904 = vld [vmem:[%s903] sm:$0xff]
  %v905 = vld [vmem:[%s903 + $0x8] sm:$0xff]
  %v906 = vld [vmem:[%s903 + $0x10] sm:$0xff]
  %907 = vmatpush.msra.mxu0 %v260
  %908 = vmatpush.msra.mxu0 %v259
  %909 = vmatpush.msra.mxu0 %v258
  %910 = vmatpush.msra.mxu0 %v257
  %911 = vmatpush.msra.mxu0 %v256
  %912 = vmatpush.msra.mxu0 %v255
  %913 = vmatpush.msra.mxu0 %v254
  %914 = vmatpush.msra.mxu0 %v253
  %915 = vmatpush.msra.mxu0 %v252
  %916 = vmatpush.msra.mxu0 %v251
  %917 = vmatpush.msra.mxu0 %v250
  %918 = vmatpush.msra.mxu0 %v249
  %919 = vmatpush.msra.mxu0 %v248
  %920 = vmatpush.msra.mxu0 %v247
  %921 = vmatpush.msra.mxu0 %v246
  %922 = vmatpush.msra.mxu0 %v245
  %923 = vmatmul.f32.gmra.mxu0 %v904
  %v924 = vpop.f32.mrf.mxu0
  %v925 = vadd.f32 0.0, %v924
  %926 = vmatmul.f32.gmra.mxu0 %v905
  %v927 = vpop.f32.mrf.mxu0
  %v928 = vadd.f32 0.0, %v927
  %929 = vmatmul.f32.gmra.mxu0 %v906
  %v930 = vpop.f32.mrf.mxu0
  %v931 = vadd.f32 0.0, %v930
  %932 = vdwg.mxu0
  %v933 = vld [vmem:[%s4 + $0x120] sm:$0xff]
  %v934 = vld [vmem:[%s4 + $0x128] sm:$0xff]
  %v935 = vld [vmem:[%s4 + $0x130] sm:$0xff]
  %v936 = vld [vmem:[%s4 + $0x138] sm:$0xff]
  %v938 = vsel %vm328, %v925, 0
  %v941 = vsel %vm328, %v928, 0
  %v944 = vsel %vm328, %v931, 0
  %946 = vmatpush.msra.mxu0 0.0
  %947 = vmatpush.msra.mxu0 0.0
  %948 = vmatpush.msra.mxu0 0.0
  %949 = vmatpush.msra.mxu0 0.0
  %950 = vmatpush.msra.mxu0 0.0
  %951 = vmatpush.msra.mxu0 0.0
  %952 = vmatpush.msra.mxu0 0.0
  %953 = vmatpush.msra.mxu0 0.0
  %954 = vmatpush.msra.mxu0 0.0
  %955 = vmatpush.msra.mxu0 0.0
  %956 = vmatpush.msra.mxu0 0.0
  %957 = vmatpush.msra.mxu0 0.0
  %958 = vmatpush.msra.mxu0 %v936
  %959 = vmatpush.msra.mxu0 %v935
  %960 = vmatpush.msra.mxu0 %v934
  %961 = vmatpush.msra.mxu0 %v933
  %962 = vmatmul.f32.gmra.mxu0 %v938
  %v963 = vpop.f32.mrf.mxu0
  %v964 = vadd.f32 0.0, %v963
  %965 = vmatmul.f32.gmra.mxu0 %v941
  %v966 = vpop.f32.mrf.mxu0
  %v967 = vadd.f32 0.0, %v966
  %968 = vmatmul.f32.gmra.mxu0 %v944
  %v969 = vpop.f32.mrf.mxu0
  %v970 = vadd.f32 0.0, %v969
  %971 = vdwg.mxu0
  %v972 = vadd.f32 %v900, %v964
  %v973 = vadd.f32 %v901, %v967
  %v974 = vadd.f32 %v902, %v970
  %s975 = scalar_lea.vmem %s3, 240
  %v976 = vld [vmem:[%s975] sm:$0xff]
  %v977 = vld [vmem:[%s975 + $0x8] sm:$0xff]
  %v978 = vld [vmem:[%s975 + $0x10] sm:$0xff]
  %979 = vmatpush.msra.mxu0 %v260
  %980 = vmatpush.msra.mxu0 %v259
  %981 = vmatpush.msra.mxu0 %v258
  %982 = vmatpush.msra.mxu0 %v257
  %983 = vmatpush.msra.mxu0 %v256
  %984 = vmatpush.msra.mxu0 %v255
  %985 = vmatpush.msra.mxu0 %v254
  %986 = vmatpush.msra.mxu0 %v253
  %987 = vmatpush.msra.mxu0 %v252
  %988 = vmatpush.msra.mxu0 %v251
  %989 = vmatpush.msra.mxu0 %v250
  %990 = vmatpush.msra.mxu0 %v249
  %991 = vmatpush.msra.mxu0 %v248
  %992 = vmatpush.msra.mxu0 %v247
  %993 = vmatpush.msra.mxu0 %v246
  %994 = vmatpush.msra.mxu0 %v245
  %995 = vmatmul.f32.gmra.mxu0 %v976
  %v996 = vpop.f32.mrf.mxu0
  %v997 = vadd.f32 0.0, %v996
  %998 = vmatmul.f32.gmra.mxu0 %v977
  %v999 = vpop.f32.mrf.mxu0
  %v1000 = vadd.f32 0.0, %v999
  %1001 = vmatmul.f32.gmra.mxu0 %v978
  %v1002 = vpop.f32.mrf.mxu0
  %v1003 = vadd.f32 0.0, %v1002
  %1004 = vdwg.mxu0
  %v1005 = vld [vmem:[%s4 + $0x140] sm:$0xff]
  %v1006 = vld [vmem:[%s4 + $0x148] sm:$0xff]
  %v1007 = vld [vmem:[%s4 + $0x150] sm:$0xff]
  %v1008 = vld [vmem:[%s4 + $0x158] sm:$0xff]
  %v1010 = vsel %vm328, %v997, 0
  %v1013 = vsel %vm328, %v1000, 0
  %v1016 = vsel %vm328, %v1003, 0
  %1018 = vmatpush.msra.mxu0 0.0
  %1019 = vmatpush.msra.mxu0 0.0
  %1020 = vmatpush.msra.mxu0 0.0
  %1021 = vmatpush.msra.mxu0 0.0
  %1022 = vmatpush.msra.mxu0 0.0
  %1023 = vmatpush.msra.mxu0 0.0
  %1024 = vmatpush.msra.mxu0 0.0
  %1025 = vmatpush.msra.mxu0 0.0
  %1026 = vmatpush.msra.mxu0 0.0
  %1027 = vmatpush.msra.mxu0 0.0
  %1028 = vmatpush.msra.mxu0 0.0
  %1029 = vmatpush.msra.mxu0 0.0
  %1030 = vmatpush.msra.mxu0 %v1008
  %1031 = vmatpush.msra.mxu0 %v1007
  %1032 = vmatpush.msra.mxu0 %v1006
  %1033 = vmatpush.msra.mxu0 %v1005
  %1034 = vmatmul.f32.gmra.mxu0 %v1010
  %v1035 = vpop.f32.mrf.mxu0
  %v1036 = vadd.f32 0.0, %v1035
  %1037 = vmatmul.f32.gmra.mxu0 %v1013
  %v1038 = vpop.f32.mrf.mxu0
  %v1039 = vadd.f32 0.0, %v1038
  %1040 = vmatmul.f32.gmra.mxu0 %v1016
  %v1041 = vpop.f32.mrf.mxu0
  %v1042 = vadd.f32 0.0, %v1041
  %1043 = vdwg.mxu0
  %v1044 = vadd.f32 %v972, %v1036
  %v1045 = vadd.f32 %v973, %v1039
  %v1046 = vadd.f32 %v974, %v1042
  %s1047 = scalar_lea.vmem %s3, 264
  %v1048 = vld [vmem:[%s1047] sm:$0xff]
  %v1049 = vld [vmem:[%s1047 + $0x8] sm:$0xff]
  %v1050 = vld [vmem:[%s1047 + $0x10] sm:$0xff]
  %1051 = vmatpush.msra.mxu0 %v260
  %1052 = vmatpush.msra.mxu0 %v259
  %1053 = vmatpush.msra.mxu0 %v258
  %1054 = vmatpush.msra.mxu0 %v257
  %1055 = vmatpush.msra.mxu0 %v256
  %1056 = vmatpush.msra.mxu0 %v255
  %1057 = vmatpush.msra.mxu0 %v254
  %1058 = vmatpush.msra.mxu0 %v253
  %1059 = vmatpush.msra.mxu0 %v252
  %1060 = vmatpush.msra.mxu0 %v251
  %1061 = vmatpush.msra.mxu0 %v250
  %1062 = vmatpush.msra.mxu0 %v249
  %1063 = vmatpush.msra.mxu0 %v248
  %1064 = vmatpush.msra.mxu0 %v247
  %1065 = vmatpush.msra.mxu0 %v246
  %1066 = vmatpush.msra.mxu0 %v245
  %1067 = vmatmul.f32.gmra.mxu0 %v1048
  %v1068 = vpop.f32.mrf.mxu0
  %v1069 = vadd.f32 0.0, %v1068
  %1070 = vmatmul.f32.gmra.mxu0 %v1049
  %v1071 = vpop.f32.mrf.mxu0
  %v1072 = vadd.f32 0.0, %v1071
  %1073 = vmatmul.f32.gmra.mxu0 %v1050
  %v1074 = vpop.f32.mrf.mxu0
  %v1075 = vadd.f32 0.0, %v1074
  %1076 = vdwg.mxu0
  %v1077 = vld [vmem:[%s4 + $0x160] sm:$0xff]
  %v1078 = vld [vmem:[%s4 + $0x168] sm:$0xff]
  %v1079 = vld [vmem:[%s4 + $0x170] sm:$0xff]
  %v1080 = vld [vmem:[%s4 + $0x178] sm:$0xff]
  %v1082 = vsel %vm328, %v1069, 0
  %v1085 = vsel %vm328, %v1072, 0
  %v1088 = vsel %vm328, %v1075, 0
  %1090 = vmatpush.msra.mxu0 0.0
  %1091 = vmatpush.msra.mxu0 0.0
  %1092 = vmatpush.msra.mxu0 0.0
  %1093 = vmatpush.msra.mxu0 0.0
  %1094 = vmatpush.msra.mxu0 0.0
  %1095 = vmatpush.msra.mxu0 0.0
  %1096 = vmatpush.msra.mxu0 0.0
  %1097 = vmatpush.msra.mxu0 0.0
  %1098 = vmatpush.msra.mxu0 0.0
  %1099 = vmatpush.msra.mxu0 0.0
  %1100 = vmatpush.msra.mxu0 0.0
  %1101 = vmatpush.msra.mxu0 0.0
  %1102 = vmatpush.msra.mxu0 %v1080
  %1103 = vmatpush.msra.mxu0 %v1079
  %1104 = vmatpush.msra.mxu0 %v1078
  %1105 = vmatpush.msra.mxu0 %v1077
  %1106 = vmatmul.f32.gmra.mxu0 %v1082
  %v1107 = vpop.f32.mrf.mxu0
  %v1108 = vadd.f32 0.0, %v1107
  %1109 = vmatmul.f32.gmra.mxu0 %v1085
  %v1110 = vpop.f32.mrf.mxu0
  %v1111 = vadd.f32 0.0, %v1110
  %1112 = vmatmul.f32.gmra.mxu0 %v1088
  %v1113 = vpop.f32.mrf.mxu0
  %v1114 = vadd.f32 0.0, %v1113
  %1115 = vdwg.mxu0
  %v1116 = vadd.f32 %v1044, %v1108
  %v1117 = vadd.f32 %v1045, %v1111
  %v1118 = vadd.f32 %v1046, %v1114
  %s1119 = scalar_lea.vmem %s3, 288
  %v1120 = vld [vmem:[%s1119] sm:$0xff]
  %v1121 = vld [vmem:[%s1119 + $0x8] sm:$0xff]
  %v1122 = vld [vmem:[%s1119 + $0x10] sm:$0xff]
  %1123 = vmatpush.msra.mxu0 %v260
  %1124 = vmatpush.msra.mxu0 %v259
  %1125 = vmatpush.msra.mxu0 %v258
  %1126 = vmatpush.msra.mxu0 %v257
  %1127 = vmatpush.msra.mxu0 %v256
  %1128 = vmatpush.msra.mxu0 %v255
  %1129 = vmatpush.msra.mxu0 %v254
  %1130 = vmatpush.msra.mxu0 %v253
  %1131 = vmatpush.msra.mxu0 %v252
  %1132 = vmatpush.msra.mxu0 %v251
  %1133 = vmatpush.msra.mxu0 %v250
  %1134 = vmatpush.msra.mxu0 %v249
  %1135 = vmatpush.msra.mxu0 %v248
  %1136 = vmatpush.msra.mxu0 %v247
  %1137 = vmatpush.msra.mxu0 %v246
  %1138 = vmatpush.msra.mxu0 %v245
  %1139 = vmatmul.f32.gmra.mxu0 %v1120
  %v1140 = vpop.f32.mrf.mxu0
  %v1141 = vadd.f32 0.0, %v1140
  %1142 = vmatmul.f32.gmra.mxu0 %v1121
  %v1143 = vpop.f32.mrf.mxu0
  %v1144 = vadd.f32 0.0, %v1143
  %1145 = vmatmul.f32.gmra.mxu0 %v1122
  %v1146 = vpop.f32.mrf.mxu0
  %v1147 = vadd.f32 0.0, %v1146
  %1148 = vdwg.mxu0
  %v1149 = vld [vmem:[%s4 + $0x180] sm:$0xff]
  %v1150 = vld [vmem:[%s4 + $0x188] sm:$0xff]
  %v1151 = vld [vmem:[%s4 + $0x190] sm:$0xff]
  %v1152 = vld [vmem:[%s4 + $0x198] sm:$0xff]
  %v1154 = vsel %vm328, %v1141, 0
  %v1157 = vsel %vm328, %v1144, 0
  %v1160 = vsel %vm328, %v1147, 0
  %1162 = vmatpush.msra.mxu0 0.0
  %1163 = vmatpush.msra.mxu0 0.0
  %1164 = vmatpush.msra.mxu0 0.0
  %1165 = vmatpush.msra.mxu0 0.0
  %1166 = vmatpush.msra.mxu0 0.0
  %1167 = vmatpush.msra.mxu0 0.0
  %1168 = vmatpush.msra.mxu0 0.0
  %1169 = vmatpush.msra.mxu0 0.0
  %1170 = vmatpush.msra.mxu0 0.0
  %1171 = vmatpush.msra.mxu0 0.0
  %1172 = vmatpush.msra.mxu0 0.0
  %1173 = vmatpush.msra.mxu0 0.0
  %1174 = vmatpush.msra.mxu0 %v1152
  %1175 = vmatpush.msra.mxu0 %v1151
  %1176 = vmatpush.msra.mxu0 %v1150
  %1177 = vmatpush.msra.mxu0 %v1149
  %1178 = vmatmul.f32.gmra.mxu0 %v1154
  %v1179 = vpop.f32.mrf.mxu0
  %v1180 = vadd.f32 0.0, %v1179
  %1181 = vmatmul.f32.gmra.mxu0 %v1157
  %v1182 = vpop.f32.mrf.mxu0
  %v1183 = vadd.f32 0.0, %v1182
  %1184 = vmatmul.f32.gmra.mxu0 %v1160
  %v1185 = vpop.f32.mrf.mxu0
  %v1186 = vadd.f32 0.0, %v1185
  %1187 = vdwg.mxu0
  %v1188 = vadd.f32 %v1116, %v1180
  %v1189 = vadd.f32 %v1117, %v1183
  %v1190 = vadd.f32 %v1118, %v1186
  %s1191 = scalar_lea.vmem %s3, 312
  %v1192 = vld [vmem:[%s1191] sm:$0xff]
  %v1193 = vld [vmem:[%s1191 + $0x8] sm:$0xff]
  %v1194 = vld [vmem:[%s1191 + $0x10] sm:$0xff]
  %1195 = vmatpush.msra.mxu0 %v260
  %1196 = vmatpush.msra.mxu0 %v259
  %1197 = vmatpush.msra.mxu0 %v258
  %1198 = vmatpush.msra.mxu0 %v257
  %1199 = vmatpush.msra.mxu0 %v256
  %1200 = vmatpush.msra.mxu0 %v255
  %1201 = vmatpush.msra.mxu0 %v254
  %1202 = vmatpush.msra.mxu0 %v253
  %1203 = vmatpush.msra.mxu0 %v252
  %1204 = vmatpush.msra.mxu0 %v251
  %1205 = vmatpush.msra.mxu0 %v250
  %1206 = vmatpush.msra.mxu0 %v249
  %1207 = vmatpush.msra.mxu0 %v248
  %1208 = vmatpush.msra.mxu0 %v247
  %1209 = vmatpush.msra.mxu0 %v246
  %1210 = vmatpush.msra.mxu0 %v245
  %1211 = vmatmul.f32.gmra.mxu0 %v1192
  %v1212 = vpop.f32.mrf.mxu0
  %v1213 = vadd.f32 0.0, %v1212
  %1214 = vmatmul.f32.gmra.mxu0 %v1193
  %v1215 = vpop.f32.mrf.mxu0
  %v1216 = vadd.f32 0.0, %v1215
  %1217 = vmatmul.f32.gmra.mxu0 %v1194
  %v1218 = vpop.f32.mrf.mxu0
  %v1219 = vadd.f32 0.0, %v1218
  %1220 = vdwg.mxu0
  %v1221 = vld [vmem:[%s4 + $0x1a0] sm:$0xff]
  %v1222 = vld [vmem:[%s4 + $0x1a8] sm:$0xff]
  %v1223 = vld [vmem:[%s4 + $0x1b0] sm:$0xff]
  %v1224 = vld [vmem:[%s4 + $0x1b8] sm:$0xff]
  %v1226 = vsel %vm328, %v1213, 0
  %v1229 = vsel %vm328, %v1216, 0
  %v1232 = vsel %vm328, %v1219, 0
  %1234 = vmatpush.msra.mxu0 0.0
  %1235 = vmatpush.msra.mxu0 0.0
  %1236 = vmatpush.msra.mxu0 0.0
  %1237 = vmatpush.msra.mxu0 0.0
  %1238 = vmatpush.msra.mxu0 0.0
  %1239 = vmatpush.msra.mxu0 0.0
  %1240 = vmatpush.msra.mxu0 0.0
  %1241 = vmatpush.msra.mxu0 0.0
  %1242 = vmatpush.msra.mxu0 0.0
  %1243 = vmatpush.msra.mxu0 0.0
  %1244 = vmatpush.msra.mxu0 0.0
  %1245 = vmatpush.msra.mxu0 0.0
  %1246 = vmatpush.msra.mxu0 %v1224
  %1247 = vmatpush.msra.mxu0 %v1223
  %1248 = vmatpush.msra.mxu0 %v1222
  %1249 = vmatpush.msra.mxu0 %v1221
  %1250 = vmatmul.f32.gmra.mxu0 %v1226
  %v1251 = vpop.f32.mrf.mxu0
  %v1252 = vadd.f32 0.0, %v1251
  %1253 = vmatmul.f32.gmra.mxu0 %v1229
  %v1254 = vpop.f32.mrf.mxu0
  %v1255 = vadd.f32 0.0, %v1254
  %1256 = vmatmul.f32.gmra.mxu0 %v1232
  %v1257 = vpop.f32.mrf.mxu0
  %v1258 = vadd.f32 0.0, %v1257
  %1259 = vdwg.mxu0
  %v1260 = vadd.f32 %v1188, %v1252
  %v1261 = vadd.f32 %v1189, %v1255
  %v1262 = vadd.f32 %v1190, %v1258
  %s1263 = scalar_lea.vmem %s3, 336
  %v1264 = vld [vmem:[%s1263] sm:$0xff]
  %v1265 = vld [vmem:[%s1263 + $0x8] sm:$0xff]
  %v1266 = vld [vmem:[%s1263 + $0x10] sm:$0xff]
  %1267 = vmatpush.msra.mxu0 %v260
  %1268 = vmatpush.msra.mxu0 %v259
  %1269 = vmatpush.msra.mxu0 %v258
  %1270 = vmatpush.msra.mxu0 %v257
  %1271 = vmatpush.msra.mxu0 %v256
  %1272 = vmatpush.msra.mxu0 %v255
  %1273 = vmatpush.msra.mxu0 %v254
  %1274 = vmatpush.msra.mxu0 %v253
  %1275 = vmatpush.msra.mxu0 %v252
  %1276 = vmatpush.msra.mxu0 %v251
  %1277 = vmatpush.msra.mxu0 %v250
  %1278 = vmatpush.msra.mxu0 %v249
  %1279 = vmatpush.msra.mxu0 %v248
  %1280 = vmatpush.msra.mxu0 %v247
  %1281 = vmatpush.msra.mxu0 %v246
  %1282 = vmatpush.msra.mxu0 %v245
  %1283 = vmatmul.f32.gmra.mxu0 %v1264
  %v1284 = vpop.f32.mrf.mxu0
  %v1285 = vadd.f32 0.0, %v1284
  %1286 = vmatmul.f32.gmra.mxu0 %v1265
  %v1287 = vpop.f32.mrf.mxu0
  %v1288 = vadd.f32 0.0, %v1287
  %1289 = vmatmul.f32.gmra.mxu0 %v1266
  %v1290 = vpop.f32.mrf.mxu0
  %v1291 = vadd.f32 0.0, %v1290
  %1292 = vdwg.mxu0
  %v1293 = vld [vmem:[%s4 + $0x1c0] sm:$0xff]
  %v1294 = vld [vmem:[%s4 + $0x1c8] sm:$0xff]
  %v1295 = vld [vmem:[%s4 + $0x1d0] sm:$0xff]
  %v1296 = vld [vmem:[%s4 + $0x1d8] sm:$0xff]
  %v1298 = vsel %vm328, %v1285, 0
  %v1301 = vsel %vm328, %v1288, 0
  %v1304 = vsel %vm328, %v1291, 0
  %1306 = vmatpush.msra.mxu0 0.0
  %1307 = vmatpush.msra.mxu0 0.0
  %1308 = vmatpush.msra.mxu0 0.0
  %1309 = vmatpush.msra.mxu0 0.0
  %1310 = vmatpush.msra.mxu0 0.0
  %1311 = vmatpush.msra.mxu0 0.0
  %1312 = vmatpush.msra.mxu0 0.0
  %1313 = vmatpush.msra.mxu0 0.0
  %1314 = vmatpush.msra.mxu0 0.0
  %1315 = vmatpush.msra.mxu0 0.0
  %1316 = vmatpush.msra.mxu0 0.0
  %1317 = vmatpush.msra.mxu0 0.0
  %1318 = vmatpush.msra.mxu0 %v1296
  %1319 = vmatpush.msra.mxu0 %v1295
  %1320 = vmatpush.msra.mxu0 %v1294
  %1321 = vmatpush.msra.mxu0 %v1293
  %1322 = vmatmul.f32.gmra.mxu0 %v1298
  %v1323 = vpop.f32.mrf.mxu0
  %v1324 = vadd.f32 0.0, %v1323
  %1325 = vmatmul.f32.gmra.mxu0 %v1301
  %v1326 = vpop.f32.mrf.mxu0
  %v1327 = vadd.f32 0.0, %v1326
  %1328 = vmatmul.f32.gmra.mxu0 %v1304
  %v1329 = vpop.f32.mrf.mxu0
  %v1330 = vadd.f32 0.0, %v1329
  %1331 = vdwg.mxu0
  %v1332 = vadd.f32 %v1260, %v1324
  %v1333 = vadd.f32 %v1261, %v1327
  %v1334 = vadd.f32 %v1262, %v1330
  %s1335 = scalar_lea.vmem %s3, 360
  %v1336 = vld [vmem:[%s1335] sm:$0xff]
  %v1337 = vld [vmem:[%s1335 + $0x8] sm:$0xff]
  %v1338 = vld [vmem:[%s1335 + $0x10] sm:$0xff]
  %1339 = vmatpush.msra.mxu0 %v260
  %1340 = vmatpush.msra.mxu0 %v259
  %1341 = vmatpush.msra.mxu0 %v258
  %1342 = vmatpush.msra.mxu0 %v257
  %1343 = vmatpush.msra.mxu0 %v256
  %1344 = vmatpush.msra.mxu0 %v255
  %1345 = vmatpush.msra.mxu0 %v254
  %1346 = vmatpush.msra.mxu0 %v253
  %1347 = vmatpush.msra.mxu0 %v252
  %1348 = vmatpush.msra.mxu0 %v251
  %1349 = vmatpush.msra.mxu0 %v250
  %1350 = vmatpush.msra.mxu0 %v249
  %1351 = vmatpush.msra.mxu0 %v248
  %1352 = vmatpush.msra.mxu0 %v247
  %1353 = vmatpush.msra.mxu0 %v246
  %1354 = vmatpush.msra.mxu0 %v245
  %1355 = vmatmul.f32.gmra.mxu0 %v1336
  %v1356 = vpop.f32.mrf.mxu0
  %v1357 = vadd.f32 0.0, %v1356
  %1358 = vmatmul.f32.gmra.mxu0 %v1337
  %v1359 = vpop.f32.mrf.mxu0
  %v1360 = vadd.f32 0.0, %v1359
  %1361 = vmatmul.f32.gmra.mxu0 %v1338
  %v1362 = vpop.f32.mrf.mxu0
  %v1363 = vadd.f32 0.0, %v1362
  %1364 = vdwg.mxu0
  %v1365 = vld [vmem:[%s4 + $0x1e0] sm:$0xff]
  %v1366 = vld [vmem:[%s4 + $0x1e8] sm:$0xff]
  %v1367 = vld [vmem:[%s4 + $0x1f0] sm:$0xff]
  %v1368 = vld [vmem:[%s4 + $0x1f8] sm:$0xff]
  %v1370 = vsel %vm328, %v1357, 0
  %v1373 = vsel %vm328, %v1360, 0
  %v1376 = vsel %vm328, %v1363, 0
  %1378 = vmatpush.msra.mxu0 0.0
  %1379 = vmatpush.msra.mxu0 0.0
  %1380 = vmatpush.msra.mxu0 0.0
  %1381 = vmatpush.msra.mxu0 0.0
  %1382 = vmatpush.msra.mxu0 0.0
  %1383 = vmatpush.msra.mxu0 0.0
  %1384 = vmatpush.msra.mxu0 0.0
  %1385 = vmatpush.msra.mxu0 0.0
  %1386 = vmatpush.msra.mxu0 0.0
  %1387 = vmatpush.msra.mxu0 0.0
  %1388 = vmatpush.msra.mxu0 0.0
  %1389 = vmatpush.msra.mxu0 0.0
  %1390 = vmatpush.msra.mxu0 %v1368
  %1391 = vmatpush.msra.mxu0 %v1367
  %1392 = vmatpush.msra.mxu0 %v1366
  %1393 = vmatpush.msra.mxu0 %v1365
  %1394 = vmatmul.f32.gmra.mxu0 %v1370
  %v1395 = vpop.f32.mrf.mxu0
  %v1396 = vadd.f32 0.0, %v1395
  %1397 = vmatmul.f32.gmra.mxu0 %v1373
  %v1398 = vpop.f32.mrf.mxu0
  %v1399 = vadd.f32 0.0, %v1398
  %1400 = vmatmul.f32.gmra.mxu0 %v1376
  %v1401 = vpop.f32.mrf.mxu0
  %v1402 = vadd.f32 0.0, %v1401
  %1403 = vdwg.mxu0
  %v1404 = vadd.f32 %v1332, %v1396
  %v1405 = vadd.f32 %v1333, %v1399
  %v1406 = vadd.f32 %v1334, %v1402
  %v1407 = vld [vmem:[%s5] sm:$0x1]
  %v1409 = vperm.slane %v1407, 0
  %v1411 = vadd.f32 %v1404, %v1409
  %v1412 = vadd.f32 %v1405, %v1409
  %v1413 = vadd.f32 %v1406, %v1409
  %v1414 = vmax.f32 %v1411, 0.0
  %v1415 = vmax.f32 %v1412, 0.0
  %v1416 = vmax.f32 %v1413, 0.0
  %v1417 = vld [vmem:[%s6] sm:$0xff]
  %vm1418 = vcmask 195584
  %v1420 = vsel %vm1418, %v1417, 0
  %1422 = vmatpush.msra.mxu0 0.0
  %1423 = vmatpush.msra.mxu0 0.0
  %1424 = vmatpush.msra.mxu0 0.0
  %1425 = vmatpush.msra.mxu0 0.0
  %1426 = vmatpush.msra.mxu0 0.0
  %1427 = vmatpush.msra.mxu0 0.0
  %1428 = vmatpush.msra.mxu0 0.0
  %1429 = vmatpush.msra.mxu0 0.0
  %1430 = vmatpush.msra.mxu0 0.0
  %1431 = vmatpush.msra.mxu0 0.0
  %1432 = vmatpush.msra.mxu0 0.0
  %1433 = vmatpush.msra.mxu0 0.0
  %1434 = vmatpush.msra.mxu0 0.0
  %1435 = vmatpush.msra.mxu0 %v1416
  %1436 = vmatpush.msra.mxu0 %v1415
  %1437 = vmatpush.msra.mxu0 %v1414
  %1438 = vmatmul.f32.gmra.mxu0 %v1420
  %v1439 = vpop.f32.mrf.mxu0
  %v1440 = vadd.f32 0.0, %v1439
  %1441 = vdwg.mxu0
  %v1442 = vld [vmem:[%s7] sm:$0xff]
  %v1443 = vld [vmem:[%s7 + $0x8] sm:$0xff]
  %v1444 = vld [vmem:[%s7 + $0x10] sm:$0xff]
  %v1445 = vld [vmem:[%s7 + $0x18] sm:$0xff]
  %v1446 = vld [vmem:[%s7 + $0x20] sm:$0xff]
  %v1447 = vld [vmem:[%s7 + $0x28] sm:$0xff]
  %v1448 = vld [vmem:[%s7 + $0x30] sm:$0xff]
  %v1449 = vld [vmem:[%s7 + $0x38] sm:$0xff]
  %s1450 = scalar_lea.vmem %s6, 8
  %v1451 = vld [vmem:[%s1450] sm:$0xff]
  %v1453 = vsel %vm1418, %v1451, 0
  %1455 = vmatpush.msra.mxu0 0.0
  %1456 = vmatpush.msra.mxu0 0.0
  %1457 = vmatpush.msra.mxu0 0.0
  %1458 = vmatpush.msra.mxu0 0.0
  %1459 = vmatpush.msra.mxu0 0.0
  %1460 = vmatpush.msra.mxu0 0.0
  %1461 = vmatpush.msra.mxu0 0.0
  %1462 = vmatpush.msra.mxu0 0.0
  %1463 = vmatpush.msra.mxu0 0.0
  %1464 = vmatpush.msra.mxu0 0.0
  %1465 = vmatpush.msra.mxu0 0.0
  %1466 = vmatpush.msra.mxu0 0.0
  %1467 = vmatpush.msra.mxu0 0.0
  %1468 = vmatpush.msra.mxu0 %v1416
  %1469 = vmatpush.msra.mxu0 %v1415
  %1470 = vmatpush.msra.mxu0 %v1414
  %1471 = vmatmul.f32.gmra.mxu0 %v1453
  %v1472 = vpop.f32.mrf.mxu0
  %v1473 = vadd.f32 0.0, %v1472
  %1474 = vdwg.mxu0
  %v1475 = vld [vmem:[%s7 + $0x40] sm:$0xff]
  %v1476 = vld [vmem:[%s7 + $0x48] sm:$0xff]
  %v1477 = vld [vmem:[%s7 + $0x50] sm:$0xff]
  %v1478 = vld [vmem:[%s7 + $0x58] sm:$0xff]
  %v1479 = vld [vmem:[%s7 + $0x60] sm:$0xff]
  %v1480 = vld [vmem:[%s7 + $0x68] sm:$0xff]
  %v1481 = vld [vmem:[%s7 + $0x70] sm:$0xff]
  %v1482 = vld [vmem:[%s7 + $0x78] sm:$0xff]
  %vm1483 = vcmask 523264
  %v1485 = vsel %vm1483, %v1473, 0
  %1487 = vmatpush.msra.mxu0 0.0
  %1488 = vmatpush.msra.mxu0 0.0
  %1489 = vmatpush.msra.mxu0 0.0
  %1490 = vmatpush.msra.mxu0 0.0
  %1491 = vmatpush.msra.mxu0 0.0
  %1492 = vmatpush.msra.mxu0 0.0
  %1493 = vmatpush.msra.mxu0 0.0
  %1494 = vmatpush.msra.mxu0 0.0
  %1495 = vmatpush.msra.mxu0 %v1482
  %1496 = vmatpush.msra.mxu0 %v1481
  %1497 = vmatpush.msra.mxu0 %v1480
  %1498 = vmatpush.msra.mxu0 %v1479
  %1499 = vmatpush.msra.mxu0 %v1478
  %1500 = vmatpush.msra.mxu0 %v1477
  %1501 = vmatpush.msra.mxu0 %v1476
  %1502 = vmatpush.msra.mxu0 %v1475
  %1503 = vmatmul.f32.gmra.mxu0 %v1485
  %v1504 = vpop.f32.mrf.mxu0
  %v1505 = vadd.f32 0.0, %v1504
  %1506 = vdwg.mxu0
  %v1508 = vsel %vm1483, %v1440, 0
  %1510 = vmatpush.msra.mxu0 0.0
  %1511 = vmatpush.msra.mxu0 0.0
  %1512 = vmatpush.msra.mxu0 0.0
  %1513 = vmatpush.msra.mxu0 0.0
  %1514 = vmatpush.msra.mxu0 0.0
  %1515 = vmatpush.msra.mxu0 0.0
  %1516 = vmatpush.msra.mxu0 0.0
  %1517 = vmatpush.msra.mxu0 0.0
  %1518 = vmatpush.msra.mxu0 %v1449
  %1519 = vmatpush.msra.mxu0 %v1448
  %1520 = vmatpush.msra.mxu0 %v1447
  %1521 = vmatpush.msra.mxu0 %v1446
  %1522 = vmatpush.msra.mxu0 %v1445
  %1523 = vmatpush.msra.mxu0 %v1444
  %1524 = vmatpush.msra.mxu0 %v1443
  %1525 = vmatpush.msra.mxu0 %v1442
  %1526 = vmatmul.f32.gmra.mxu0 %v1508
  %v1527 = vpop.f32.mrf.mxu0
  %v1528 = vadd.f32 %v1505, %v1527
  %1529 = vdwg.mxu0
  %s1530 = scalar_lea.vmem %s6, 16
  %v1531 = vld [vmem:[%s1530] sm:$0xff]
  %v1533 = vsel %vm1418, %v1531, 0
  %1535 = vmatpush.msra.mxu0 0.0
  %1536 = vmatpush.msra.mxu0 0.0
  %1537 = vmatpush.msra.mxu0 0.0
  %1538 = vmatpush.msra.mxu0 0.0
  %1539 = vmatpush.msra.mxu0 0.0
  %1540 = vmatpush.msra.mxu0 0.0
  %1541 = vmatpush.msra.mxu0 0.0
  %1542 = vmatpush.msra.mxu0 0.0
  %1543 = vmatpush.msra.mxu0 0.0
  %1544 = vmatpush.msra.mxu0 0.0
  %1545 = vmatpush.msra.mxu0 0.0
  %1546 = vmatpush.msra.mxu0 0.0
  %1547 = vmatpush.msra.mxu0 0.0
  %1548 = vmatpush.msra.mxu0 %v1416
  %1549 = vmatpush.msra.mxu0 %v1415
  %1550 = vmatpush.msra.mxu0 %v1414
  %1551 = vmatmul.f32.gmra.mxu0 %v1533
  %v1552 = vpop.f32.mrf.mxu0
  %v1553 = vadd.f32 0.0, %v1552
  %1554 = vdwg.mxu0
  %v1555 = vld [vmem:[%s7 + $0x80] sm:$0xff]
  %v1556 = vld [vmem:[%s7 + $0x88] sm:$0xff]
  %v1557 = vld [vmem:[%s7 + $0x90] sm:$0xff]
  %v1558 = vld [vmem:[%s7 + $0x98] sm:$0xff]
  %v1559 = vld [vmem:[%s7 + $0xa0] sm:$0xff]
  %v1560 = vld [vmem:[%s7 + $0xa8] sm:$0xff]
  %v1561 = vld [vmem:[%s7 + $0xb0] sm:$0xff]
  %v1562 = vld [vmem:[%s7 + $0xb8] sm:$0xff]
  %v1564 = vsel %vm1483, %v1553, 0
  %1566 = vmatpush.msra.mxu0 0.0
  %1567 = vmatpush.msra.mxu0 0.0
  %1568 = vmatpush.msra.mxu0 0.0
  %1569 = vmatpush.msra.mxu0 0.0
  %1570 = vmatpush.msra.mxu0 0.0
  %1571 = vmatpush.msra.mxu0 0.0
  %1572 = vmatpush.msra.mxu0 0.0
  %1573 = vmatpush.msra.mxu0 0.0
  %1574 = vmatpush.msra.mxu0 %v1562
  %1575 = vmatpush.msra.mxu0 %v1561
  %1576 = vmatpush.msra.mxu0 %v1560
  %1577 = vmatpush.msra.mxu0 %v1559
  %1578 = vmatpush.msra.mxu0 %v1558
  %1579 = vmatpush.msra.mxu0 %v1557
  %1580 = vmatpush.msra.mxu0 %v1556
  %1581 = vmatpush.msra.mxu0 %v1555
  %1582 = vmatmul.f32.gmra.mxu0 %v1564
  %v1583 = vpop.f32.mrf.mxu0
  %v1584 = vadd.f32 0.0, %v1583
  %1585 = vdwg.mxu0
  %v1586 = vadd.f32 %v1528, %v1584
  %s1587 = scalar_lea.vmem %s6, 24
  %v1588 = vld [vmem:[%s1587] sm:$0xff]
  %v1590 = vsel %vm1418, %v1588, 0
  %1592 = vmatpush.msra.mxu0 0.0
  %1593 = vmatpush.msra.mxu0 0.0
  %1594 = vmatpush.msra.mxu0 0.0
  %1595 = vmatpush.msra.mxu0 0.0
  %1596 = vmatpush.msra.mxu0 0.0
  %1597 = vmatpush.msra.mxu0 0.0
  %1598 = vmatpush.msra.mxu0 0.0
  %1599 = vmatpush.msra.mxu0 0.0
  %1600 = vmatpush.msra.mxu0 0.0
  %1601 = vmatpush.msra.mxu0 0.0
  %1602 = vmatpush.msra.mxu0 0.0
  %1603 = vmatpush.msra.mxu0 0.0
  %1604 = vmatpush.msra.mxu0 0.0
  %1605 = vmatpush.msra.mxu0 %v1416
  %1606 = vmatpush.msra.mxu0 %v1415
  %1607 = vmatpush.msra.mxu0 %v1414
  %1608 = vmatmul.f32.gmra.mxu0 %v1590
  %v1609 = vpop.f32.mrf.mxu0
  %v1610 = vadd.f32 0.0, %v1609
  %1611 = vdwg.mxu0
  %v1612 = vld [vmem:[%s7 + $0xc0] sm:$0xff]
  %v1613 = vld [vmem:[%s7 + $0xc8] sm:$0xff]
  %v1614 = vld [vmem:[%s7 + $0xd0] sm:$0xff]
  %v1615 = vld [vmem:[%s7 + $0xd8] sm:$0xff]
  %v1616 = vld [vmem:[%s7 + $0xe0] sm:$0xff]
  %v1617 = vld [vmem:[%s7 + $0xe8] sm:$0xff]
  %v1618 = vld [vmem:[%s7 + $0xf0] sm:$0xff]
  %v1619 = vld [vmem:[%s7 + $0xf8] sm:$0xff]
  %v1621 = vsel %vm1483, %v1610, 0
  %1623 = vmatpush.msra.mxu0 0.0
  %1624 = vmatpush.msra.mxu0 0.0
  %1625 = vmatpush.msra.mxu0 0.0
  %1626 = vmatpush.msra.mxu0 0.0
  %1627 = vmatpush.msra.mxu0 0.0
  %1628 = vmatpush.msra.mxu0 0.0
  %1629 = vmatpush.msra.mxu0 0.0
  %1630 = vmatpush.msra.mxu0 0.0
  %1631 = vmatpush.msra.mxu0 %v1619
  %1632 = vmatpush.msra.mxu0 %v1618
  %1633 = vmatpush.msra.mxu0 %v1617
  %1634 = vmatpush.msra.mxu0 %v1616
  %1635 = vmatpush.msra.mxu0 %v1615
  %1636 = vmatpush.msra.mxu0 %v1614
  %1637 = vmatpush.msra.mxu0 %v1613
  %1638 = vmatpush.msra.mxu0 %v1612
  %1639 = vmatmul.f32.gmra.mxu0 %v1621
  %v1640 = vpop.f32.mrf.mxu0
  %v1641 = vadd.f32 0.0, %v1640
  %1642 = vdwg.mxu0
  %v1643 = vadd.f32 %v1586, %v1641
  %s1644 = scalar_lea.vmem %s6, 32
  %v1645 = vld [vmem:[%s1644] sm:$0xff]
  %v1647 = vsel %vm1418, %v1645, 0
  %1649 = vmatpush.msra.mxu0 0.0
  %1650 = vmatpush.msra.mxu0 0.0
  %1651 = vmatpush.msra.mxu0 0.0
  %1652 = vmatpush.msra.mxu0 0.0
  %1653 = vmatpush.msra.mxu0 0.0
  %1654 = vmatpush.msra.mxu0 0.0
  %1655 = vmatpush.msra.mxu0 0.0
  %1656 = vmatpush.msra.mxu0 0.0
  %1657 = vmatpush.msra.mxu0 0.0
  %1658 = vmatpush.msra.mxu0 0.0
  %1659 = vmatpush.msra.mxu0 0.0
  %1660 = vmatpush.msra.mxu0 0.0
  %1661 = vmatpush.msra.mxu0 0.0
  %1662 = vmatpush.msra.mxu0 %v1416
  %1663 = vmatpush.msra.mxu0 %v1415
  %1664 = vmatpush.msra.mxu0 %v1414
  %1665 = vmatmul.f32.gmra.mxu0 %v1647
  %v1666 = vpop.f32.mrf.mxu0
  %v1667 = vadd.f32 0.0, %v1666
  %1668 = vdwg.mxu0
  %v1669 = vld [vmem:[%s7 + $0x100] sm:$0xff]
  %v1670 = vld [vmem:[%s7 + $0x108] sm:$0xff]
  %v1671 = vld [vmem:[%s7 + $0x110] sm:$0xff]
  %v1672 = vld [vmem:[%s7 + $0x118] sm:$0xff]
  %v1673 = vld [vmem:[%s7 + $0x120] sm:$0xff]
  %v1674 = vld [vmem:[%s7 + $0x128] sm:$0xff]
  %v1675 = vld [vmem:[%s7 + $0x130] sm:$0xff]
  %v1676 = vld [vmem:[%s7 + $0x138] sm:$0xff]
  %v1678 = vsel %vm1483, %v1667, 0
  %1680 = vmatpush.msra.mxu0 0.0
  %1681 = vmatpush.msra.mxu0 0.0
  %1682 = vmatpush.msra.mxu0 0.0
  %1683 = vmatpush.msra.mxu0 0.0
  %1684 = vmatpush.msra.mxu0 0.0
  %1685 = vmatpush.msra.mxu0 0.0
  %1686 = vmatpush.msra.mxu0 0.0
  %1687 = vmatpush.msra.mxu0 0.0
  %1688 = vmatpush.msra.mxu0 %v1676
  %1689 = vmatpush.msra.mxu0 %v1675
  %1690 = vmatpush.msra.mxu0 %v1674
  %1691 = vmatpush.msra.mxu0 %v1673
  %1692 = vmatpush.msra.mxu0 %v1672
  %1693 = vmatpush.msra.mxu0 %v1671
  %1694 = vmatpush.msra.mxu0 %v1670
  %1695 = vmatpush.msra.mxu0 %v1669
  %1696 = vmatmul.f32.gmra.mxu0 %v1678
  %v1697 = vpop.f32.mrf.mxu0
  %v1698 = vadd.f32 0.0, %v1697
  %1699 = vdwg.mxu0
  %v1700 = vadd.f32 %v1643, %v1698
  %s1701 = scalar_lea.vmem %s6, 40
  %v1702 = vld [vmem:[%s1701] sm:$0xff]
  %v1704 = vsel %vm1418, %v1702, 0
  %1706 = vmatpush.msra.mxu0 0.0
  %1707 = vmatpush.msra.mxu0 0.0
  %1708 = vmatpush.msra.mxu0 0.0
  %1709 = vmatpush.msra.mxu0 0.0
  %1710 = vmatpush.msra.mxu0 0.0
  %1711 = vmatpush.msra.mxu0 0.0
  %1712 = vmatpush.msra.mxu0 0.0
  %1713 = vmatpush.msra.mxu0 0.0
  %1714 = vmatpush.msra.mxu0 0.0
  %1715 = vmatpush.msra.mxu0 0.0
  %1716 = vmatpush.msra.mxu0 0.0
  %1717 = vmatpush.msra.mxu0 0.0
  %1718 = vmatpush.msra.mxu0 0.0
  %1719 = vmatpush.msra.mxu0 %v1416
  %1720 = vmatpush.msra.mxu0 %v1415
  %1721 = vmatpush.msra.mxu0 %v1414
  %1722 = vmatmul.f32.gmra.mxu0 %v1704
  %v1723 = vpop.f32.mrf.mxu0
  %v1724 = vadd.f32 0.0, %v1723
  %1725 = vdwg.mxu0
  %v1726 = vld [vmem:[%s7 + $0x140] sm:$0xff]
  %v1727 = vld [vmem:[%s7 + $0x148] sm:$0xff]
  %v1728 = vld [vmem:[%s7 + $0x150] sm:$0xff]
  %v1729 = vld [vmem:[%s7 + $0x158] sm:$0xff]
  %v1730 = vld [vmem:[%s7 + $0x160] sm:$0xff]
  %v1731 = vld [vmem:[%s7 + $0x168] sm:$0xff]
  %v1732 = vld [vmem:[%s7 + $0x170] sm:$0xff]
  %v1733 = vld [vmem:[%s7 + $0x178] sm:$0xff]
  %v1735 = vsel %vm1483, %v1724, 0
  %1737 = vmatpush.msra.mxu0 0.0
  %1738 = vmatpush.msra.mxu0 0.0
  %1739 = vmatpush.msra.mxu0 0.0
  %1740 = vmatpush.msra.mxu0 0.0
  %1741 = vmatpush.msra.mxu0 0.0
  %1742 = vmatpush.msra.mxu0 0.0
  %1743 = vmatpush.msra.mxu0 0.0
  %1744 = vmatpush.msra.mxu0 0.0
  %1745 = vmatpush.msra.mxu0 %v1733
  %1746 = vmatpush.msra.mxu0 %v1732
  %1747 = vmatpush.msra.mxu0 %v1731
  %1748 = vmatpush.msra.mxu0 %v1730
  %1749 = vmatpush.msra.mxu0 %v1729
  %1750 = vmatpush.msra.mxu0 %v1728
  %1751 = vmatpush.msra.mxu0 %v1727
  %1752 = vmatpush.msra.mxu0 %v1726
  %1753 = vmatmul.f32.gmra.mxu0 %v1735
  %v1754 = vpop.f32.mrf.mxu0
  %v1755 = vadd.f32 0.0, %v1754
  %1756 = vdwg.mxu0
  %v1757 = vadd.f32 %v1700, %v1755
  %s1758 = scalar_lea.vmem %s6, 48
  %v1759 = vld [vmem:[%s1758] sm:$0xff]
  %v1761 = vsel %vm1418, %v1759, 0
  %1763 = vmatpush.msra.mxu0 0.0
  %1764 = vmatpush.msra.mxu0 0.0
  %1765 = vmatpush.msra.mxu0 0.0
  %1766 = vmatpush.msra.mxu0 0.0
  %1767 = vmatpush.msra.mxu0 0.0
  %1768 = vmatpush.msra.mxu0 0.0
  %1769 = vmatpush.msra.mxu0 0.0
  %1770 = vmatpush.msra.mxu0 0.0
  %1771 = vmatpush.msra.mxu0 0.0
  %1772 = vmatpush.msra.mxu0 0.0
  %1773 = vmatpush.msra.mxu0 0.0
  %1774 = vmatpush.msra.mxu0 0.0
  %1775 = vmatpush.msra.mxu0 0.0
  %1776 = vmatpush.msra.mxu0 %v1416
  %1777 = vmatpush.msra.mxu0 %v1415
  %1778 = vmatpush.msra.mxu0 %v1414
  %1779 = vmatmul.f32.gmra.mxu0 %v1761
  %v1780 = vpop.f32.mrf.mxu0
  %v1781 = vadd.f32 0.0, %v1780
  %1782 = vdwg.mxu0
  %v1783 = vld [vmem:[%s7 + $0x180] sm:$0xff]
  %v1784 = vld [vmem:[%s7 + $0x188] sm:$0xff]
  %v1785 = vld [vmem:[%s7 + $0x190] sm:$0xff]
  %v1786 = vld [vmem:[%s7 + $0x198] sm:$0xff]
  %v1787 = vld [vmem:[%s7 + $0x1a0] sm:$0xff]
  %v1788 = vld [vmem:[%s7 + $0x1a8] sm:$0xff]
  %v1789 = vld [vmem:[%s7 + $0x1b0] sm:$0xff]
  %v1790 = vld [vmem:[%s7 + $0x1b8] sm:$0xff]
  %v1792 = vsel %vm1483, %v1781, 0
  %1794 = vmatpush.msra.mxu0 0.0
  %1795 = vmatpush.msra.mxu0 0.0
  %1796 = vmatpush.msra.mxu0 0.0
  %1797 = vmatpush.msra.mxu0 0.0
  %1798 = vmatpush.msra.mxu0 0.0
  %1799 = vmatpush.msra.mxu0 0.0
  %1800 = vmatpush.msra.mxu0 0.0
  %1801 = vmatpush.msra.mxu0 0.0
  %1802 = vmatpush.msra.mxu0 %v1790
  %1803 = vmatpush.msra.mxu0 %v1789
  %1804 = vmatpush.msra.mxu0 %v1788
  %1805 = vmatpush.msra.mxu0 %v1787
  %1806 = vmatpush.msra.mxu0 %v1786
  %1807 = vmatpush.msra.mxu0 %v1785
  %1808 = vmatpush.msra.mxu0 %v1784
  %1809 = vmatpush.msra.mxu0 %v1783
  %1810 = vmatmul.f32.gmra.mxu0 %v1792
  %v1811 = vpop.f32.mrf.mxu0
  %v1812 = vadd.f32 0.0, %v1811
  %1813 = vdwg.mxu0
  %v1814 = vadd.f32 %v1757, %v1812
  %s1815 = scalar_lea.vmem %s6, 56
  %v1816 = vld [vmem:[%s1815] sm:$0xff]
  %v1818 = vsel %vm1418, %v1816, 0
  %1820 = vmatpush.msra.mxu0 0.0
  %1821 = vmatpush.msra.mxu0 0.0
  %1822 = vmatpush.msra.mxu0 0.0
  %1823 = vmatpush.msra.mxu0 0.0
  %1824 = vmatpush.msra.mxu0 0.0
  %1825 = vmatpush.msra.mxu0 0.0
  %1826 = vmatpush.msra.mxu0 0.0
  %1827 = vmatpush.msra.mxu0 0.0
  %1828 = vmatpush.msra.mxu0 0.0
  %1829 = vmatpush.msra.mxu0 0.0
  %1830 = vmatpush.msra.mxu0 0.0
  %1831 = vmatpush.msra.mxu0 0.0
  %1832 = vmatpush.msra.mxu0 0.0
  %1833 = vmatpush.msra.mxu0 %v1416
  %1834 = vmatpush.msra.mxu0 %v1415
  %1835 = vmatpush.msra.mxu0 %v1414
  %1836 = vmatmul.f32.gmra.mxu0 %v1818
  %v1837 = vpop.f32.mrf.mxu0
  %v1838 = vadd.f32 0.0, %v1837
  %1839 = vdwg.mxu0
  %v1840 = vld [vmem:[%s7 + $0x1c0] sm:$0xff]
  %v1841 = vld [vmem:[%s7 + $0x1c8] sm:$0xff]
  %v1842 = vld [vmem:[%s7 + $0x1d0] sm:$0xff]
  %v1843 = vld [vmem:[%s7 + $0x1d8] sm:$0xff]
  %v1844 = vld [vmem:[%s7 + $0x1e0] sm:$0xff]
  %v1845 = vld [vmem:[%s7 + $0x1e8] sm:$0xff]
  %v1846 = vld [vmem:[%s7 + $0x1f0] sm:$0xff]
  %v1847 = vld [vmem:[%s7 + $0x1f8] sm:$0xff]
  %v1849 = vsel %vm1483, %v1838, 0
  %1851 = vmatpush.msra.mxu0 0.0
  %1852 = vmatpush.msra.mxu0 0.0
  %1853 = vmatpush.msra.mxu0 0.0
  %1854 = vmatpush.msra.mxu0 0.0
  %1855 = vmatpush.msra.mxu0 0.0
  %1856 = vmatpush.msra.mxu0 0.0
  %1857 = vmatpush.msra.mxu0 0.0
  %1858 = vmatpush.msra.mxu0 0.0
  %1859 = vmatpush.msra.mxu0 %v1847
  %1860 = vmatpush.msra.mxu0 %v1846
  %1861 = vmatpush.msra.mxu0 %v1845
  %1862 = vmatpush.msra.mxu0 %v1844
  %1863 = vmatpush.msra.mxu0 %v1843
  %1864 = vmatpush.msra.mxu0 %v1842
  %1865 = vmatpush.msra.mxu0 %v1841
  %1866 = vmatpush.msra.mxu0 %v1840
  %1867 = vmatmul.f32.gmra.mxu0 %v1849
  %v1868 = vpop.f32.mrf.mxu0
  %v1869 = vadd.f32 0.0, %v1868
  %1870 = vdwg.mxu0
  %v1871 = vadd.f32 %v1814, %v1869
  %s1872 = scalar_lea.vmem %s6, 64
  %v1873 = vld [vmem:[%s1872] sm:$0xff]
  %v1875 = vsel %vm1418, %v1873, 0
  %1877 = vmatpush.msra.mxu0 0.0
  %1878 = vmatpush.msra.mxu0 0.0
  %1879 = vmatpush.msra.mxu0 0.0
  %1880 = vmatpush.msra.mxu0 0.0
  %1881 = vmatpush.msra.mxu0 0.0
  %1882 = vmatpush.msra.mxu0 0.0
  %1883 = vmatpush.msra.mxu0 0.0
  %1884 = vmatpush.msra.mxu0 0.0
  %1885 = vmatpush.msra.mxu0 0.0
  %1886 = vmatpush.msra.mxu0 0.0
  %1887 = vmatpush.msra.mxu0 0.0
  %1888 = vmatpush.msra.mxu0 0.0
  %1889 = vmatpush.msra.mxu0 0.0
  %1890 = vmatpush.msra.mxu0 %v1416
  %1891 = vmatpush.msra.mxu0 %v1415
  %1892 = vmatpush.msra.mxu0 %v1414
  %1893 = vmatmul.f32.gmra.mxu0 %v1875
  %v1894 = vpop.f32.mrf.mxu0
  %v1895 = vadd.f32 0.0, %v1894
  %1896 = vdwg.mxu0
  %v1897 = vld [vmem:[%s7 + $0x200] sm:$0xff]
  %v1898 = vld [vmem:[%s7 + $0x208] sm:$0xff]
  %v1899 = vld [vmem:[%s7 + $0x210] sm:$0xff]
  %v1900 = vld [vmem:[%s7 + $0x218] sm:$0xff]
  %v1901 = vld [vmem:[%s7 + $0x220] sm:$0xff]
  %v1902 = vld [vmem:[%s7 + $0x228] sm:$0xff]
  %v1903 = vld [vmem:[%s7 + $0x230] sm:$0xff]
  %v1904 = vld [vmem:[%s7 + $0x238] sm:$0xff]
  %v1906 = vsel %vm1483, %v1895, 0
  %1908 = vmatpush.msra.mxu0 0.0
  %1909 = vmatpush.msra.mxu0 0.0
  %1910 = vmatpush.msra.mxu0 0.0
  %1911 = vmatpush.msra.mxu0 0.0
  %1912 = vmatpush.msra.mxu0 0.0
  %1913 = vmatpush.msra.mxu0 0.0
  %1914 = vmatpush.msra.mxu0 0.0
  %1915 = vmatpush.msra.mxu0 0.0
  %1916 = vmatpush.msra.mxu0 %v1904
  %1917 = vmatpush.msra.mxu0 %v1903
  %1918 = vmatpush.msra.mxu0 %v1902
  %1919 = vmatpush.msra.mxu0 %v1901
  %1920 = vmatpush.msra.mxu0 %v1900
  %1921 = vmatpush.msra.mxu0 %v1899
  %1922 = vmatpush.msra.mxu0 %v1898
  %1923 = vmatpush.msra.mxu0 %v1897
  %1924 = vmatmul.f32.gmra.mxu0 %v1906
  %v1925 = vpop.f32.mrf.mxu0
  %v1926 = vadd.f32 0.0, %v1925
  %1927 = vdwg.mxu0
  %v1928 = vadd.f32 %v1871, %v1926
  %v1929 = vld [vmem:[%s8] sm:$0x1]
  %v1931 = vperm.slane %v1929, 0
  %v1933 = vadd.f32 %v1928, %v1931
  %v1934 = vmax.f32 %v1933, 0.0
  %v1935 = vld [vmem:[%s9] sm:$0xff]
  %vm1936 = vcmask 64512
  %v1938 = vsel %vm1936, %v1935, 0
  %1940 = vmatpush.msra.mxu0 0.0
  %1941 = vmatpush.msra.mxu0 0.0
  %1942 = vmatpush.msra.mxu0 0.0
  %1943 = vmatpush.msra.mxu0 0.0
  %1944 = vmatpush.msra.mxu0 0.0
  %1945 = vmatpush.msra.mxu0 0.0
  %1946 = vmatpush.msra.mxu0 0.0
  %1947 = vmatpush.msra.mxu0 0.0
  %1948 = vmatpush.msra.mxu0 0.0
  %1949 = vmatpush.msra.mxu0 0.0
  %1950 = vmatpush.msra.mxu0 0.0
  %1951 = vmatpush.msra.mxu0 0.0
  %1952 = vmatpush.msra.mxu0 0.0
  %1953 = vmatpush.msra.mxu0 0.0
  %1954 = vmatpush.msra.mxu0 0.0
  %1955 = vmatpush.msra.mxu0 %v1934
  %1956 = vmatmul.f32.gmra.mxu0 %v1938
  %v1957 = vpop.f32.mrf.mxu0
  %v1958 = vadd.f32 0.0, %v1957
  %1959 = vdwg.mxu0
  %v1960 = vld [vmem:[%s10] sm:$0xff]
  %v1961 = vld [vmem:[%s10 + $0x8] sm:$0xff]
  %v1962 = vld [vmem:[%s10 + $0x10] sm:$0xff]
  %v1963 = vld [vmem:[%s10 + $0x18] sm:$0xff]
  %v1964 = vld [vmem:[%s10 + $0x20] sm:$0xff]
  %v1965 = vld [vmem:[%s10 + $0x28] sm:$0xff]
  %v1966 = vld [vmem:[%s10 + $0x30] sm:$0xff]
  %v1967 = vld [vmem:[%s10 + $0x38] sm:$0xff]
  %v1968 = vld [vmem:[%s10 + $0x40] sm:$0xff]
  %v1969 = vld [vmem:[%s10 + $0x48] sm:$0xff]
  %v1970 = vld [vmem:[%s10 + $0x50] sm:$0xff]
  %v1971 = vld [vmem:[%s10 + $0x58] sm:$0xff]
  %v1972 = vld [vmem:[%s10 + $0x60] sm:$0xff]
  %v1973 = vld [vmem:[%s10 + $0x68] sm:$0xff]
  %v1974 = vld [vmem:[%s10 + $0x70] sm:$0xff]
  %v1975 = vld [vmem:[%s10 + $0x78] sm:$0xff]
  %v1976 = vld [vmem:[%s10 + $0x80] sm:$0xff]
  %v1977 = vld [vmem:[%s10 + $0x88] sm:$0xff]
  %v1978 = vld [vmem:[%s10 + $0x90] sm:$0xff]
  %v1979 = vld [vmem:[%s10 + $0x98] sm:$0xff]
  %v1980 = vld [vmem:[%s10 + $0xa0] sm:$0xff]
  %v1981 = vld [vmem:[%s10 + $0xa8] sm:$0xff]
  %v1982 = vld [vmem:[%s10 + $0xb0] sm:$0xff]
  %v1983 = vld [vmem:[%s10 + $0xb8] sm:$0xff]
  %v1984 = vld [vmem:[%s10 + $0xc0] sm:$0xff]
  %v1985 = vld [vmem:[%s10 + $0xc8] sm:$0xff]
  %v1986 = vld [vmem:[%s10 + $0xd0] sm:$0xff]
  %v1987 = vld [vmem:[%s10 + $0xd8] sm:$0xff]
  %v1988 = vld [vmem:[%s10 + $0xe0] sm:$0xff]
  %v1989 = vld [vmem:[%s10 + $0xe8] sm:$0xff]
  %v1990 = vld [vmem:[%s10 + $0xf0] sm:$0xff]
  %v1991 = vld [vmem:[%s10 + $0xf8] sm:$0xff]
  %v1992 = vld [vmem:[%s11] sm:$0xf]
  %v1994 = vperm.slane %v1992, 0
  %v1995 = vperm.slane %v1992, 1
  %v1996 = vperm.slane %v1992, 2
  %v1997 = vperm.slane %v1992, 3
  %v2003 = vsel %vm1483, %v1958, 0
  %2005 = vmatpush.msra.mxu0 0.0
  %2006 = vmatpush.msra.mxu0 0.0
  %2007 = vmatpush.msra.mxu0 0.0
  %2008 = vmatpush.msra.mxu0 0.0
  %2009 = vmatpush.msra.mxu0 0.0
  %2010 = vmatpush.msra.mxu0 0.0
  %2011 = vmatpush.msra.mxu0 0.0
  %2012 = vmatpush.msra.mxu0 0.0
  %2013 = vmatpush.msra.mxu0 %v1988
  %2014 = vmatpush.msra.mxu0 %v1984
  %2015 = vmatpush.msra.mxu0 %v1980
  %2016 = vmatpush.msra.mxu0 %v1976
  %2017 = vmatpush.msra.mxu0 %v1972
  %2018 = vmatpush.msra.mxu0 %v1968
  %2019 = vmatpush.msra.mxu0 %v1964
  %2020 = vmatpush.msra.mxu0 %v1960
  %2021 = vmatmul.f32.gmra.mxu0 %v2003
  %v2022 = vpop.f32.mrf.mxu0
  %v2023 = vadd.f32 %v1994, %v2022
  %2024 = vdwg.mxu0
  %2025 = vmatpush.msra.mxu0 0.0
  %2026 = vmatpush.msra.mxu0 0.0
  %2027 = vmatpush.msra.mxu0 0.0
  %2028 = vmatpush.msra.mxu0 0.0
  %2029 = vmatpush.msra.mxu0 0.0
  %2030 = vmatpush.msra.mxu0 0.0
  %2031 = vmatpush.msra.mxu0 0.0
  %2032 = vmatpush.msra.mxu0 0.0
  %2033 = vmatpush.msra.mxu0 %v1989
  %2034 = vmatpush.msra.mxu0 %v1985
  %2035 = vmatpush.msra.mxu0 %v1981
  %2036 = vmatpush.msra.mxu0 %v1977
  %2037 = vmatpush.msra.mxu0 %v1973
  %2038 = vmatpush.msra.mxu0 %v1969
  %2039 = vmatpush.msra.mxu0 %v1965
  %2040 = vmatpush.msra.mxu0 %v1961
  %2041 = vmatmul.f32.gmra.mxu0 %v2003
  %v2042 = vpop.f32.mrf.mxu0
  %v2043 = vadd.f32 %v1995, %v2042
  %2044 = vdwg.mxu0
  %2045 = vmatpush.msra.mxu0 0.0
  %2046 = vmatpush.msra.mxu0 0.0
  %2047 = vmatpush.msra.mxu0 0.0
  %2048 = vmatpush.msra.mxu0 0.0
  %2049 = vmatpush.msra.mxu0 0.0
  %2050 = vmatpush.msra.mxu0 0.0
  %2051 = vmatpush.msra.mxu0 0.0
  %2052 = vmatpush.msra.mxu0 0.0
  %2053 = vmatpush.msra.mxu0 %v1990
  %2054 = vmatpush.msra.mxu0 %v1986
  %2055 = vmatpush.msra.mxu0 %v1982
  %2056 = vmatpush.msra.mxu0 %v1978
  %2057 = vmatpush.msra.mxu0 %v1974
  %2058 = vmatpush.msra.mxu0 %v1970
  %2059 = vmatpush.msra.mxu0 %v1966
  %2060 = vmatpush.msra.mxu0 %v1962
  %2061 = vmatmul.f32.gmra.mxu0 %v2003
  %v2062 = vpop.f32.mrf.mxu0
  %v2063 = vadd.f32 %v1996, %v2062
  %2064 = vdwg.mxu0
  %2065 = vmatpush.msra.mxu0 0.0
  %2066 = vmatpush.msra.mxu0 0.0
  %2067 = vmatpush.msra.mxu0 0.0
  %2068 = vmatpush.msra.mxu0 0.0
  %2069 = vmatpush.msra.mxu0 0.0
  %2070 = vmatpush.msra.mxu0 0.0
  %2071 = vmatpush.msra.mxu0 0.0
  %2072 = vmatpush.msra.mxu0 0.0
  %2073 = vmatpush.msra.mxu0 %v1991
  %2074 = vmatpush.msra.mxu0 %v1987
  %2075 = vmatpush.msra.mxu0 %v1983
  %2076 = vmatpush.msra.mxu0 %v1979
  %2077 = vmatpush.msra.mxu0 %v1975
  %2078 = vmatpush.msra.mxu0 %v1971
  %2079 = vmatpush.msra.mxu0 %v1967
  %2080 = vmatpush.msra.mxu0 %v1963
  %2081 = vmatmul.f32.gmra.mxu0 %v2003
  %v2082 = vpop.f32.mrf.mxu0
  %v2083 = vadd.f32 %v1997, %v2082
  %2084 = vdwg.mxu0
  %v2085 = vmax.f32 %v2023, 0.0
  %v2086 = vmax.f32 %v2043, 0.0
  %v2087 = vmax.f32 %v2063, 0.0
  %v2088 = vmax.f32 %v2083, 0.0
  %v2089 = vld [vmem:[%s12] sm:$0xff]
  %v2090 = vld [vmem:[%s12 + $0x8] sm:$0xff]
  %v2091 = vld [vmem:[%s12 + $0x10] sm:$0xff]
  %v2092 = vld [vmem:[%s12 + $0x18] sm:$0xff]
  %v2093 = vld [vmem:[%s12 + $0x20] sm:$0xff]
  %v2094 = vld [vmem:[%s12 + $0x28] sm:$0xff]
  %v2095 = vld [vmem:[%s12 + $0x30] sm:$0xff]
  %v2096 = vld [vmem:[%s12 + $0x38] sm:$0xff]
  %v2097 = vld [vmem:[%s12 + $0x40] sm:$0xff]
  %v2098 = vld [vmem:[%s12 + $0x48] sm:$0xff]
  %v2099 = vld [vmem:[%s12 + $0x50] sm:$0xff]
  %v2100 = vld [vmem:[%s12 + $0x58] sm:$0xff]
  %v2101 = vld [vmem:[%s12 + $0x60] sm:$0xff]
  %v2102 = vld [vmem:[%s12 + $0x68] sm:$0xff]
  %v2103 = vld [vmem:[%s12 + $0x70] sm:$0xff]
  %v2104 = vld [vmem:[%s12 + $0x78] sm:$0xff]
  %v2105 = vld [vmem:[%s12 + $0x80] sm:$0xff]
  %v2106 = vld [vmem:[%s12 + $0x88] sm:$0xff]
  %v2107 = vld [vmem:[%s12 + $0x90] sm:$0xff]
  %v2108 = vld [vmem:[%s12 + $0x98] sm:$0xff]
  %v2109 = vld [vmem:[%s12 + $0xa0] sm:$0xff]
  %v2110 = vld [vmem:[%s12 + $0xa8] sm:$0xff]
  %v2111 = vld [vmem:[%s12 + $0xb0] sm:$0xff]
  %v2112 = vld [vmem:[%s12 + $0xb8] sm:$0xff]
  %v2113 = vld [vmem:[%s12 + $0xc0] sm:$0xff]
  %v2114 = vld [vmem:[%s12 + $0xc8] sm:$0xff]
  %v2115 = vld [vmem:[%s12 + $0xd0] sm:$0xff]
  %v2116 = vld [vmem:[%s12 + $0xd8] sm:$0xff]
  %v2117 = vld [vmem:[%s12 + $0xe0] sm:$0xff]
  %v2118 = vld [vmem:[%s12 + $0xe8] sm:$0xff]
  %v2119 = vld [vmem:[%s12 + $0xf0] sm:$0xff]
  %v2120 = vld [vmem:[%s12 + $0xf8] sm:$0xff]
  %v2121 = vld [vmem:[%s12 + $0x100] sm:$0xff]
  %v2122 = vld [vmem:[%s12 + $0x108] sm:$0xff]
  %v2123 = vld [vmem:[%s12 + $0x110] sm:$0xff]
  %v2124 = vld [vmem:[%s12 + $0x118] sm:$0xff]
  %v2125 = vld [vmem:[%s12 + $0x120] sm:$0xff]
  %v2126 = vld [vmem:[%s12 + $0x128] sm:$0xff]
  %v2127 = vld [vmem:[%s12 + $0x130] sm:$0xff]
  %v2128 = vld [vmem:[%s12 + $0x138] sm:$0xff]
  %v2129 = vld [vmem:[%s12 + $0x140] sm:$0xff]
  %v2130 = vld [vmem:[%s12 + $0x148] sm:$0xff]
  %v2131 = vld [vmem:[%s12 + $0x150] sm:$0xff]
  %v2132 = vld [vmem:[%s12 + $0x158] sm:$0xff]
  %v2133 = vld [vmem:[%s12 + $0x160] sm:$0xff]
  %v2134 = vld [vmem:[%s12 + $0x168] sm:$0xff]
  %v2135 = vld [vmem:[%s12 + $0x170] sm:$0xff]
  %v2136 = vld [vmem:[%s12 + $0x178] sm:$0xff]
  %v2137 = vld [vmem:[%s12 + $0x180] sm:$0xff]
  %v2138 = vld [vmem:[%s12 + $0x188] sm:$0xff]
  %v2139 = vld [vmem:[%s12 + $0x190] sm:$0xff]
  %v2140 = vld [vmem:[%s12 + $0x198] sm:$0xff]
  %v2141 = vld [vmem:[%s12 + $0x1a0] sm:$0xff]
  %v2142 = vld [vmem:[%s12 + $0x1a8] sm:$0xff]
  %v2143 = vld [vmem:[%s12 + $0x1b0] sm:$0xff]
  %v2144 = vld [vmem:[%s12 + $0x1b8] sm:$0xff]
  %v2145 = vld [vmem:[%s12 + $0x1c0] sm:$0xff]
  %v2146 = vld [vmem:[%s12 + $0x1c8] sm:$0xff]
  %v2147 = vld [vmem:[%s12 + $0x1d0] sm:$0xff]
  %v2148 = vld [vmem:[%s12 + $0x1d8] sm:$0xff]
  %v2149 = vld [vmem:[%s12 + $0x1e0] sm:$0xff]
  %v2150 = vld [vmem:[%s12 + $0x1e8] sm:$0xff]
  %v2151 = vld [vmem:[%s12 + $0x1f0] sm:$0xff]
  %v2152 = vld [vmem:[%s12 + $0x1f8] sm:$0xff]
  %v2153 = vld [vmem:[%s13] sm:$0x1]
  %v2155 = vperm.slane %v2153, 0
  %2157 = vmatpush.msra.mxu0 %v2104
  %2158 = vmatpush.msra.mxu0 %v2103
  %2159 = vmatpush.msra.mxu0 %v2102
  %2160 = vmatpush.msra.mxu0 %v2101
  %2161 = vmatpush.msra.mxu0 %v2100
  %2162 = vmatpush.msra.mxu0 %v2099
  %2163 = vmatpush.msra.mxu0 %v2098
  %2164 = vmatpush.msra.mxu0 %v2097
  %2165 = vmatpush.msra.mxu0 %v2096
  %2166 = vmatpush.msra.mxu0 %v2095
  %2167 = vmatpush.msra.mxu0 %v2094
  %2168 = vmatpush.msra.mxu0 %v2093
  %2169 = vmatpush.msra.mxu0 %v2092
  %2170 = vmatpush.msra.mxu0 %v2091
  %2171 = vmatpush.msra.mxu0 %v2090
  %2172 = vmatpush.msra.mxu0 %v2089
  %2173 = vmatmul.f32.gmra.mxu0 %v2085
  %v2174 = vpop.f32.mrf.mxu0
  %v2175 = vadd.f32 %v2155, %v2174
  %2176 = vdwg.mxu0
  %2177 = vmatpush.msra.mxu0 %v2120
  %2178 = vmatpush.msra.mxu0 %v2119
  %2179 = vmatpush.msra.mxu0 %v2118
  %2180 = vmatpush.msra.mxu0 %v2117
  %2181 = vmatpush.msra.mxu0 %v2116
  %2182 = vmatpush.msra.mxu0 %v2115
  %2183 = vmatpush.msra.mxu0 %v2114
  %2184 = vmatpush.msra.mxu0 %v2113
  %2185 = vmatpush.msra.mxu0 %v2112
  %2186 = vmatpush.msra.mxu0 %v2111
  %2187 = vmatpush.msra.mxu0 %v2110
  %2188 = vmatpush.msra.mxu0 %v2109
  %2189 = vmatpush.msra.mxu0 %v2108
  %2190 = vmatpush.msra.mxu0 %v2107
  %2191 = vmatpush.msra.mxu0 %v2106
  %2192 = vmatpush.msra.mxu0 %v2105
  %2193 = vmatmul.f32.gmra.mxu0 %v2086
  %v2194 = vpop.f32.mrf.mxu0
  %v2195 = vadd.f32 %v2175, %v2194
  %2196 = vdwg.mxu0
  %2197 = vmatpush.msra.mxu0 %v2136
  %2198 = vmatpush.msra.mxu0 %v2135
  %2199 = vmatpush.msra.mxu0 %v2134
  %2200 = vmatpush.msra.mxu0 %v2133
  %2201 = vmatpush.msra.mxu0 %v2132
  %2202 = vmatpush.msra.mxu0 %v2131
  %2203 = vmatpush.msra.mxu0 %v2130
  %2204 = vmatpush.msra.mxu0 %v2129
  %2205 = vmatpush.msra.mxu0 %v2128
  %2206 = vmatpush.msra.mxu0 %v2127
  %2207 = vmatpush.msra.mxu0 %v2126
  %2208 = vmatpush.msra.mxu0 %v2125
  %2209 = vmatpush.msra.mxu0 %v2124
  %2210 = vmatpush.msra.mxu0 %v2123
  %2211 = vmatpush.msra.mxu0 %v2122
  %2212 = vmatpush.msra.mxu0 %v2121
  %2213 = vmatmul.f32.gmra.mxu0 %v2087
  %v2214 = vpop.f32.mrf.mxu0
  %v2215 = vadd.f32 %v2195, %v2214
  %2216 = vdwg.mxu0
  %2217 = vmatpush.msra.mxu0 %v2152
  %2218 = vmatpush.msra.mxu0 %v2151
  %2219 = vmatpush.msra.mxu0 %v2150
  %2220 = vmatpush.msra.mxu0 %v2149
  %2221 = vmatpush.msra.mxu0 %v2148
  %2222 = vmatpush.msra.mxu0 %v2147
  %2223 = vmatpush.msra.mxu0 %v2146
  %2224 = vmatpush.msra.mxu0 %v2145
  %2225 = vmatpush.msra.mxu0 %v2144
  %2226 = vmatpush.msra.mxu0 %v2143
  %2227 = vmatpush.msra.mxu0 %v2142
  %2228 = vmatpush.msra.mxu0 %v2141
  %2229 = vmatpush.msra.mxu0 %v2140
  %2230 = vmatpush.msra.mxu0 %v2139
  %2231 = vmatpush.msra.mxu0 %v2138
  %2232 = vmatpush.msra.mxu0 %v2137
  %2233 = vmatmul.f32.gmra.mxu0 %v2088
  %v2234 = vpop.f32.mrf.mxu0
  %v2235 = vadd.f32 %v2215, %v2234
  %2236 = vdwg.mxu0
  %2237 = vst [vmem:[%s14] sm:$0xff] %v2235
  // Predicated region
  $region58: #{forward.1} parent=0 // pred_check
    _
  $region59: #{forward.1} parent=0 // pred_check_branch
    %2239 = sbr.rel (0) target = $region61
  $region60: #{forward.1} parent=0 // pred_region
    _
  $region61: #{forward.1} parent=0 // pred_fallthru
    _
  // Predicated region
  $region62: #{forward.1} parent=0 // pred_check
    _
  $region63: #{forward.1} parent=0 // pred_check_branch
    %2241 = sbr.rel (0) target = $region65
  $region64: #{forward.1} parent=0 // pred_region
    _
  $region65: #{forward.1} parent=0 // pred_fallthru
    _

</llo_original>
